<compile_context>
chip_gen: v7x
topology: tpu7x:2x2x1
jax: 0.10.0
libtpu: 0.0.40
codegen_flags: <defaults>
</compile_context>

<pallas_src>
import math
import functools

import jax
import jax.numpy as jnp
from jax import lax
from jax.experimental import pallas as pl
from jax.experimental.pallas import tpu as pltpu


def _attention_kernel(tb, o_size, q_size, d, approx_recip,
                      inp_ref, mem_ref,
                      wq_ref, bq_ref,
                      wkv_ref, bkv_ref,
                      wo_ref, bo_ref,
                      out_ref, attn_ref):
    compute_dtype = inp_ref.dtype

    # Flatten the batch tile into the matmul M-dim so the MXU sees
    # (TB*O, D) / (TB*Q, D) LHS tiles instead of tiny per-batch (O, D) ones.
    x = inp_ref[...].reshape(tb * o_size, d)
    m = mem_ref[...].reshape(tb * q_size, d)

    # Q projection (1/sqrt(D) already folded into Wq/bq by the wrapper) and
    # fused K|V projection: one matmul with a 2D-wide N-dim, f32 accumulation.
    q = jnp.dot(x, wq_ref[...], preferred_element_type=jnp.float32) + bq_ref[...]
    kv = jnp.dot(m, wkv_ref[...], preferred_element_type=jnp.float32) + bkv_ref[...]

    qb = q.reshape(tb, o_size, d).astype(compute_dtype)
    kb = kv[:, :d].reshape(tb, q_size, d).astype(compute_dtype)
    vb = kv[:, d:].reshape(tb, q_size, d).astype(compute_dtype)

    # Attention scores: contract the shared D axis directly (no k.T / XLU
    # transpose), batched over the TB tile.
    s = lax.dot_general(
        qb, kb,
        dimension_numbers=(((2,), (2,)), ((0,), (0,))),
        preferred_element_type=jnp.float32)                 # (TB, O, Q)

    # Numerically-stable softmax over the queried axis, kept in f32 (v5e has
    # no bf16 VPU/EUP; f32 here is the right partition on every generation).
    s = s - jnp.max(s, axis=-1, keepdims=True)
    e = jnp.exp(s)
    p = e * pl.reciprocal(jnp.sum(e, axis=-1, keepdims=True), approx=approx_recip)

    # Weighted sum of values, then output projection + tanh.
    o = lax.dot_general(
        p.astype(compute_dtype), vb,
        dimension_numbers=(((2,), (1,)), ((0,), (0,))),
        preferred_element_type=jnp.float32)                 # (TB, O, D)
    o = o.reshape(tb * o_size, d).astype(compute_dtype)
    o = jnp.tanh(jnp.dot(o, wo_ref[...], preferred_element_type=jnp.float32)
                 + bo_ref[...])

    out_ref[...] = o.reshape(tb, o_size, d).astype(out_ref.dtype)
    attn_ref[...] = p.astype(attn_ref.dtype)


def _vmem_limit_bytes():
    """Per-generation scoped VMEM limit: ~3/4 of physical (48 MiB on v7x's
    64 MiB, 96 MiB on v5e/v6e's 128 MiB). Conservative fallback if the query
    is unavailable."""
    phys = 64 * 1024 * 1024
    try:
        phys = int(pltpu.get_tpu_info().vmem_capacity_bytes)
    except Exception:
        pass
    return min((phys * 3) // 4, 112 * 1024 * 1024)


def _choose_batch_tile(B, O, Q, D, in_isz, out_isz, attn_isz, weight_bytes,
                       vmem_budget, target_rows=512, max_rows=2048):
    """VMEM-aware batch tile.  Prefer TB*O >= target_rows (fills the MXU
    M-dim); among tiles that hit the target prefer the smallest that still
    leaves >= 2 grid steps (megacore sharding on multi-TC chips).  For small
    B, absorb the whole batch (no forced extra steps on single-TC chips)."""
    def tile_bytes(tb):
        # Double-buffered streamed tiles (in + out) ...
        stream = 2 * tb * (O * D * in_isz + Q * D * in_isz
                           + O * D * out_isz + O * Q * attn_isz)
        # ... plus f32 intermediates (q, kv, o, scores/probs) with some slack.
        inter = tb * (3 * O * D + 4 * Q * D + 4 * O * Q) * 4
        return stream + inter

    divisors = [t for t in range(1, B + 1) if B % t == 0]
    fits = [t for t in divisors
            if t * O <= max_rows and weight_bytes + tile_bytes(t) <= vmem_budget]
    if not fits:
        return 1
    hit = [t for t in fits if t * O >= target_rows]
    if hit:
        multi = [t for t in hit if B // t >= 2]
        return min(multi) if multi else min(hit)
    return max(fits)


def cross_modal_attention(inp, memory, params, *,
                          compute_dtype=jnp.float32,
                          approx_recip=True,
                          out_dtype=jnp.float32,
                          attn_dtype=jnp.float32,
                          batch_tile=None):
    """inp: (B, O, D) or (B, D); memory: (B, Q, D).
    Returns (output (B,O,D) or (B,D), attn (B,O,Q))."""
    squeeze = inp.ndim == 2
    if squeeze:
        inp = inp[:, None, :]

    B, O, D = inp.shape
    _, Q, _ = memory.shape
    scale = 1.0 / math.sqrt(D)

    # Fold the attention scale into the query projection (params are static):
    # softmax(((x Wq + bq) k^T) * s) == softmax((x (s*Wq) + s*bq) k^T).
    wq = (params["wq"] * scale).astype(compute_dtype)
    wkv = jnp.concatenate([params["wk"], params["wv"]], axis=1).astype(compute_dtype)
    wo = params["wo"].astype(compute_dtype)
    bq = (params["bq"] * scale).astype(jnp.float32).reshape(1, D)
    bkv = jnp.concatenate([params["bk"], params["bv"]]).astype(jnp.float32).reshape(1, 2 * D)
    bo = params["bo"].astype(jnp.float32).reshape(1, D)

    # Stream activations in the compute dtype (bf16 path: half the DMA bytes
    # and input VMEM footprint; f32 path: no-op).
    inp_c = inp.astype(compute_dtype)
    mem_c = memory.astype(compute_dtype)

    vmem_limit = _vmem_limit_bytes()

    if batch_tile is None:
        w_isz = jnp.dtype(compute_dtype).itemsize
        # Conservative: assume weights end up double-buffered.
        weight_bytes = 2 * (4 * D * D + 4 * D) * w_isz
        tb = _choose_batch_tile(
            B, O, Q, D,
            in_isz=jnp.dtype(compute_dtype).itemsize,
            out_isz=jnp.dtype(out_dtype).itemsize,
            attn_isz=jnp.dtype(attn_dtype).itemsize,
            weight_bytes=weight_bytes,
            vmem_budget=int(vmem_limit * 0.6))
    else:
        tb = batch_tile
    assert B % tb == 0, "batch_tile must divide batch size"

    kernel = functools.partial(_attention_kernel, tb, O, Q, D, approx_recip)

    def build_call(single_buffer_weights):
        # Weights/biases: constant index_map -> resident, not re-fetched per
        # step; optionally single-buffered (no redundant double buffer).
        wkw = dict(pipeline_mode=pl.Buffered(1)) if single_buffer_weights else {}
        w_dd = pl.BlockSpec((D, D), lambda b: (0, 0), **wkw)
        w_d2d = pl.BlockSpec((D, 2 * D), lambda b: (0, 0), **wkw)
        b_d = pl.BlockSpec((1, D), lambda b: (0, 0), **wkw)
        b_2d = pl.BlockSpec((1, 2 * D), lambda b: (0, 0), **wkw)

        return pl.pallas_call(
            kernel,
            out_shape=(
                jax.ShapeDtypeStruct((B, O, D), out_dtype),
                jax.ShapeDtypeStruct((B, O, Q), attn_dtype),
            ),
            grid_spec=pltpu.PrefetchScalarGridSpec(
                num_scalar_prefetch=0,
                grid=(B // tb,),
                in_specs=[
                    pl.BlockSpec((tb, O, D), lambda b: (b, 0, 0)),   # input
                    pl.BlockSpec((tb, Q, D), lambda b: (b, 0, 0)),   # memory
                    w_dd, b_d,                                       # Wq, bq
                    w_d2d, b_2d,                                     # Wk|Wv, bk|bv
                    w_dd, b_d,                                       # Wo, bo
                ],
                out_specs=[
                    pl.BlockSpec((tb, O, D), lambda b: (b, 0, 0)),
                    pl.BlockSpec((tb, O, Q), lambda b: (b, 0, 0)),
                ],
            ),
            compiler_params=pltpu.CompilerParams(
                dimension_semantics=("parallel",),
                vmem_limit_bytes=vmem_limit,
            ),
        )

    args = (inp_c, mem_c, wq, bq, wkv, bkv, wo, bo)
    try:
        out, attn = build_call(single_buffer_weights=True)(*args)
    except Exception:
        # Fallback if pipeline_mode=pl.Buffered(1) is not supported by this
        # jax/Mosaic version: identical semantics, just double-buffered weights.
        out, attn = build_call(single_buffer_weights=False)(*args)

    if squeeze:
        out = out[:, 0, :]
    return out, attn


def _xavier_uniform(key, shape):
    fan_in, fan_out = shape
    bound = math.sqrt(6.0 / (fan_in + fan_out))
    return jax.random.uniform(key, shape, jnp.float32, -bound, bound)


def _linear_bias(key, fan_in, out_dim):
    bound = 1.0 / math.sqrt(fan_in)
    return jax.random.uniform(key, (out_dim,), jnp.float32, -bound, bound)


def make_params(key, dim):
    keys = jax.random.split(key, 8)
    return {
        "wq": _xavier_uniform(keys[0], (dim, dim)),
        "bq": _linear_bias(keys[1], dim, dim),
        "wk": _xavier_uniform(keys[2], (dim, dim)),
        "bk": _linear_bias(keys[3], dim, dim),
        "wv": _xavier_uniform(keys[4], (dim, dim)),
        "bv": _linear_bias(keys[5], dim, dim),
        "wo": _xavier_uniform(keys[6], (dim, dim)),
        "bo": _linear_bias(keys[7], dim, dim),
    }


def reference(inp, memory, params):
    scale = 1.0 / math.sqrt(inp.shape[-1])
    q = inp @ params["wq"] + params["bq"]
    k = memory @ params["wk"] + params["bk"]
    v = memory @ params["wv"] + params["bv"]
    s = jnp.einsum("bod,bqd->boq", q, k) * scale
    p = jax.nn.softmax(s, axis=-1)
    o = jnp.einsum("boq,bqd->bod", p, v)
    o = jnp.tanh(o @ params["wo"] + params["bo"])
    return o, p


if __name__ == "__main__":
    B, O, Q, D = 2, 8, 8, 32
    key = jax.random.PRNGKey(0)
    k_in, k_mem, k_par = jax.random.split(key, 3)

    inp = jax.random.normal(k_in, (B, O, D), jnp.float32)
    memory = jax.random.normal(k_mem, (B, Q, D), jnp.float32)
    params = make_params(k_par, D)

    out_ref, attn_ref = reference(inp, memory, params)

    # Exact path: f32 MXU operands + exact reciprocal -> tight tolerance.
    out, attn = cross_modal_attention(
        inp, memory, params, compute_dtype=jnp.float32, approx_recip=False)
    out = jax.block_until_ready(out)
    attn = jax.block_until_ready(attn)
    assert jnp.allclose(out, out_ref, atol=1e-5, rtol=1e-5)
    assert jnp.allclose(attn, attn_ref, atol=1e-5, rtol=1e-5)

    # Fast path: bf16 MXU operands / bf16-streamed activations (f32
    # accumulation, f32 softmax) + EUP approx reciprocal.
    out_bf, attn_bf = cross_modal_attention(
        inp, memory, params, compute_dtype=jnp.bfloat16, approx_recip=True)
    out_bf = jax.block_until_ready(out_bf)
    attn_bf = jax.block_until_ready(attn_bf)
    assert jnp.allclose(out_bf, out_ref, atol=3e-2, rtol=3e-2)
    assert jnp.allclose(attn_bf, attn_ref, atol=3e-2, rtol=3e-2)

    print("KERNEL_OK")
</pallas_src>

<mosaic_0001>
module attributes {stable_mosaic.version = 11 : i64} {
  func.func @_attention_kernel(%arg0: i32, %arg1: memref<2x8x32xf32, #tpu.memory_space<vmem>>, %arg2: memref<2x8x32xf32, #tpu.memory_space<vmem>>, %arg3: memref<32x32xf32, #tpu.memory_space<vmem>>, %arg4: memref<1x32xf32, #tpu.memory_space<vmem>>, %arg5: memref<32x64xf32, #tpu.memory_space<vmem>>, %arg6: memref<1x64xf32, #tpu.memory_space<vmem>>, %arg7: memref<32x32xf32, #tpu.memory_space<vmem>>, %arg8: memref<1x32xf32, #tpu.memory_space<vmem>>, %arg9: memref<2x8x32xf32, #tpu.memory_space<vmem>>, %arg10: memref<2x8x8xf32, #tpu.memory_space<vmem>>) attributes {dimension_semantics = [#tpu.dimension_semantics<parallel>], iteration_bounds = array<i64: 1>, scalar_prefetch = 0 : i64, scratch_operands = 0 : i64, tpu.core_type = #tpu.core_type<tc>, window_params = [{transform_indices = @transform_0, window_bounds = array<i64: 2, 8, 32>}, {transform_indices = @transform_1, window_bounds = array<i64: 2, 8, 32>}, {pipeline_mode = #tpu.pipeline_mode<synchronous>, transform_indices = @transform_2, window_bounds = array<i64: 32, 32>}, {pipeline_mode = #tpu.pipeline_mode<synchronous>, transform_indices = @transform_3, window_bounds = array<i64: 1, 32>}, {pipeline_mode = #tpu.pipeline_mode<synchronous>, transform_indices = @transform_4, window_bounds = array<i64: 32, 64>}, {pipeline_mode = #tpu.pipeline_mode<synchronous>, transform_indices = @transform_5, window_bounds = array<i64: 1, 64>}, {pipeline_mode = #tpu.pipeline_mode<synchronous>, transform_indices = @transform_6, window_bounds = array<i64: 32, 32>}, {pipeline_mode = #tpu.pipeline_mode<synchronous>, transform_indices = @transform_7, window_bounds = array<i64: 1, 32>}, {transform_indices = @transform_8, window_bounds = array<i64: 2, 8, 32>}, {transform_indices = @transform_9, window_bounds = array<i64: 2, 8, 8>}]} {
    %c0 = arith.constant 0 : index
    %c0_0 = arith.constant 0 : index
    %c0_1 = arith.constant 0 : index
    %0 = vector.load %arg1[%c0, %c0_0, %c0_1] : memref<2x8x32xf32, #tpu.memory_space<vmem>>, vector<2x8x32xf32>
    %1 = vector.shape_cast %0 : vector<2x8x32xf32> to vector<16x32xf32>
    %c0_2 = arith.constant 0 : index
    %c0_3 = arith.constant 0 : index
    %c0_4 = arith.constant 0 : index
    %2 = vector.load %arg2[%c0_2, %c0_3, %c0_4] : memref<2x8x32xf32, #tpu.memory_space<vmem>>, vector<2x8x32xf32>
    %3 = vector.shape_cast %2 : vector<2x8x32xf32> to vector<16x32xf32>
    %c0_5 = arith.constant 0 : index
    %c0_6 = arith.constant 0 : index
    %4 = vector.load %arg3[%c0_5, %c0_6] : memref<32x32xf32, #tpu.memory_space<vmem>>, vector<32x32xf32>
    %cst = arith.constant dense<0.000000e+00> : vector<16x32xf32>
    %5 = tpu.matmul %1, %4, %cst {dimension_numbers = #tpu.dot_dimension_numbers<[1], [0], [0], [1], [0, 0, 1, 1], [], []>} : vector<16x32xf32>, vector<32x32xf32>, vector<16x32xf32> -> vector<16x32xf32>
    %c0_7 = arith.constant 0 : index
    %c0_8 = arith.constant 0 : index
    %6 = vector.load %arg4[%c0_7, %c0_8] : memref<1x32xf32, #tpu.memory_space<vmem>>, vector<1x32xf32>
    %7 = vector.broadcast %6 : vector<1x32xf32> to vector<16x32xf32>
    %8 = arith.addf %5, %7 : vector<16x32xf32>
    %c0_9 = arith.constant 0 : index
    %c0_10 = arith.constant 0 : index
    %9 = vector.load %arg5[%c0_9, %c0_10] : memref<32x64xf32, #tpu.memory_space<vmem>>, vector<32x64xf32>
    %cst_11 = arith.constant dense<0.000000e+00> : vector<16x64xf32>
    %10 = tpu.matmul %3, %9, %cst_11 {dimension_numbers = #tpu.dot_dimension_numbers<[1], [0], [0], [1], [0, 0, 1, 1], [], []>} : vector<16x32xf32>, vector<32x64xf32>, vector<16x64xf32> -> vector<16x64xf32>
    %c0_12 = arith.constant 0 : index
    %c0_13 = arith.constant 0 : index
    %11 = vector.load %arg6[%c0_12, %c0_13] : memref<1x64xf32, #tpu.memory_space<vmem>>, vector<1x64xf32>
    %12 = vector.broadcast %11 : vector<1x64xf32> to vector<16x64xf32>
    %13 = arith.addf %10, %12 : vector<16x64xf32>
    %14 = vector.shape_cast %8 : vector<16x32xf32> to vector<2x8x32xf32>
    %15 = vector.extract_strided_slice %13 {offsets = [0, 0], sizes = [16, 32], strides = [1, 1]} : vector<16x64xf32> to vector<16x32xf32>
    %16 = vector.shape_cast %15 : vector<16x32xf32> to vector<2x8x32xf32>
    %17 = vector.extract_strided_slice %13 {offsets = [0, 32], sizes = [16, 32], strides = [1, 1]} : vector<16x64xf32> to vector<16x32xf32>
    %18 = vector.shape_cast %17 : vector<16x32xf32> to vector<2x8x32xf32>
    %cst_14 = arith.constant dense<0.000000e+00> : vector<2x8x8xf32>
    %19 = tpu.matmul %14, %16, %cst_14 {dimension_numbers = #tpu.dot_dimension_numbers<[2], [2], [1], [1], [0, 0, 0, 1, 1, 1], [0], [0]>} : vector<2x8x32xf32>, vector<2x8x32xf32>, vector<2x8x8xf32> -> vector<2x8x8xf32>
    %cst_15 = arith.constant dense<0xFF800000> : vector<2x8xf32>
    %20 = vector.multi_reduction <maximumf>, %19, %cst_15 [2] : vector<2x8x8xf32> to vector<2x8xf32>
    %21 = vector.shape_cast %20 : vector<2x8xf32> to vector<2x8x1xf32>
    %22 = vector.broadcast %21 : vector<2x8x1xf32> to vector<2x8x8xf32>
    %23 = arith.subf %19, %22 : vector<2x8x8xf32>
    %24 = math.exp %23 : vector<2x8x8xf32>
    %cst_16 = arith.constant dense<0.000000e+00> : vector<2x8xf32>
    %25 = vector.multi_reduction <add>, %24, %cst_16 [2] : vector<2x8x8xf32> to vector<2x8xf32>
    %26 = vector.shape_cast %25 : vector<2x8xf32> to vector<2x8x1xf32>
    %27 = tpu.reciprocal %26 : vector<2x8x1xf32> -> vector<2x8x1xf32>
    %28 = vector.broadcast %27 : vector<2x8x1xf32> to vector<2x8x8xf32>
    %29 = arith.mulf %24, %28 : vector<2x8x8xf32>
    %cst_17 = arith.constant dense<0.000000e+00> : vector<2x8x32xf32>
    %30 = tpu.matmul %29, %18, %cst_17 {dimension_numbers = #tpu.dot_dimension_numbers<[2], [1], [1], [2], [0, 0, 0, 1, 1, 2], [0], [0]>} : vector<2x8x8xf32>, vector<2x8x32xf32>, vector<2x8x32xf32> -> vector<2x8x32xf32>
    %31 = vector.shape_cast %30 : vector<2x8x32xf32> to vector<16x32xf32>
    %c0_18 = arith.constant 0 : index
    %c0_19 = arith.constant 0 : index
    %32 = vector.load %arg7[%c0_18, %c0_19] : memref<32x32xf32, #tpu.memory_space<vmem>>, vector<32x32xf32>
    %cst_20 = arith.constant dense<0.000000e+00> : vector<16x32xf32>
    %33 = tpu.matmul %31, %32, %cst_20 {dimension_numbers = #tpu.dot_dimension_numbers<[1], [0], [0], [1], [0, 0, 1, 1], [], []>} : vector<16x32xf32>, vector<32x32xf32>, vector<16x32xf32> -> vector<16x32xf32>
    %c0_21 = arith.constant 0 : index
    %c0_22 = arith.constant 0 : index
    %34 = vector.load %arg8[%c0_21, %c0_22] : memref<1x32xf32, #tpu.memory_space<vmem>>, vector<1x32xf32>
    %35 = vector.broadcast %34 : vector<1x32xf32> to vector<16x32xf32>
    %36 = arith.addf %33, %35 : vector<16x32xf32>
    %37 = math.tanh %36 : vector<16x32xf32>
    %38 = vector.shape_cast %37 : vector<16x32xf32> to vector<2x8x32xf32>
    %c0_23 = arith.constant 0 : index
    %c0_24 = arith.constant 0 : index
    %c0_25 = arith.constant 0 : index
    %39 = vector.load %arg9[%c0_23, %c0_24, %c0_25] : memref<2x8x32xf32, #tpu.memory_space<vmem>>, vector<2x8x32xf32>
    tpu.vector_store %arg9[%c0_23, %c0_24, %c0_25], %38 {strides = array<i32>} : memref<2x8x32xf32, #tpu.memory_space<vmem>>, vector<2x8x32xf32>,
    %c0_26 = arith.constant 0 : index
    %c0_27 = arith.constant 0 : index
    %c0_28 = arith.constant 0 : index
    %40 = vector.load %arg10[%c0_26, %c0_27, %c0_28] : memref<2x8x8xf32, #tpu.memory_space<vmem>>, vector<2x8x8xf32>
    tpu.vector_store %arg10[%c0_26, %c0_27, %c0_28], %29 {strides = array<i32>} : memref<2x8x8xf32, #tpu.memory_space<vmem>>, vector<2x8x8xf32>,
    return
  }
  func.func @transform_0(%arg0: i32) -> (i32, i32, i32) {
    %c0_i32 = arith.constant 0 : i32
    %c0_i32_0 = arith.constant 0 : i32
    %c0_i32_1 = arith.constant 0 : i32
    return %arg0, %c0_i32, %c0_i32_0 : i32, i32, i32
  }
  func.func @transform_1(%arg0: i32) -> (i32, i32, i32) {
    %c0_i32 = arith.constant 0 : i32
    %c0_i32_0 = arith.constant 0 : i32
    %c0_i32_1 = arith.constant 0 : i32
    return %arg0, %c0_i32, %c0_i32_0 : i32, i32, i32
  }
  func.func @transform_2(%arg0: i32) -> (i32, i32) {
    %c0_i32 = arith.constant 0 : i32
    %c0_i32_0 = arith.constant 0 : i32
    %c0_i32_1 = arith.constant 0 : i32
    return %c0_i32, %c0_i32_0 : i32, i32
  }
  func.func @transform_3(%arg0: i32) -> (i32, i32) {
    %c0_i32 = arith.constant 0 : i32
    %c0_i32_0 = arith.constant 0 : i32
    %c0_i32_1 = arith.constant 0 : i32
    return %c0_i32, %c0_i32_0 : i32, i32
  }
  func.func @transform_4(%arg0: i32) -> (i32, i32) {
    %c0_i32 = arith.constant 0 : i32
    %c0_i32_0 = arith.constant 0 : i32
    %c0_i32_1 = arith.constant 0 : i32
    return %c0_i32, %c0_i32_0 : i32, i32
  }
  func.func @transform_5(%arg0: i32) -> (i32, i32) {
    %c0_i32 = arith.constant 0 : i32
    %c0_i32_0 = arith.constant 0 : i32
    %c0_i32_1 = arith.constant 0 : i32
    return %c0_i32, %c0_i32_0 : i32, i32
  }
  func.func @transform_6(%arg0: i32) -> (i32, i32) {
    %c0_i32 = arith.constant 0 : i32
    %c0_i32_0 = arith.constant 0 : i32
    %c0_i32_1 = arith.constant 0 : i32
    return %c0_i32, %c0_i32_0 : i32, i32
  }
  func.func @transform_7(%arg0: i32) -> (i32, i32) {
    %c0_i32 = arith.constant 0 : i32
    %c0_i32_0 = arith.constant 0 : i32
    %c0_i32_1 = arith.constant 0 : i32
    return %c0_i32, %c0_i32_0 : i32, i32
  }
  func.func @transform_8(%arg0: i32) -> (i32, i32, i32) {
    %c0_i32 = arith.constant 0 : i32
    %c0_i32_0 = arith.constant 0 : i32
    %c0_i32_1 = arith.constant 0 : i32
    return %arg0, %c0_i32, %c0_i32_0 : i32, i32, i32
  }
  func.func @transform_9(%arg0: i32) -> (i32, i32, i32) {
    %c0_i32 = arith.constant 0 : i32
    %c0_i32_0 = arith.constant 0 : i32
    %c0_i32_1 = arith.constant 0 : i32
    return %arg0, %c0_i32, %c0_i32_0 : i32, i32, i32
  }
}

module attributes {stable_mosaic.version = 11 : i64} {
  func.func @_attention_kernel(%arg0: i32, %arg1: memref<2x8x32xf32, #tpu.memory_space<vmem>>, %arg2: memref<2x8x32xf32, #tpu.memory_space<vmem>>, %arg3: memref<32x32xf32, #tpu.memory_space<vmem>>, %arg4: memref<1x32xf32, #tpu.memory_space<vmem>>, %arg5: memref<32x64xf32, #tpu.memory_space<vmem>>, %arg6: memref<1x64xf32, #tpu.memory_space<vmem>>, %arg7: memref<32x32xf32, #tpu.memory_space<vmem>>, %arg8: memref<1x32xf32, #tpu.memory_space<vmem>>, %arg9: memref<2x8x32xf32, #tpu.memory_space<vmem>>, %arg10: memref<2x8x8xf32, #tpu.memory_space<vmem>>) attributes {dimension_semantics = [#tpu.dimension_semantics<parallel>], iteration_bounds = array<i64: 1>, scalar_prefetch = 0 : i64, scratch_operands = 0 : i64, tpu.core_type = #tpu.core_type<tc>, window_params = [{transform_indices = @transform_0, window_bounds = array<i64: 2, 8, 32>}, {transform_indices = @transform_1, window_bounds = array<i64: 2, 8, 32>}, {pipeline_mode = #tpu.pipeline_mode<synchronous>, transform_indices = @transform_2, window_bounds = array<i64: 32, 32>}, {pipeline_mode = #tpu.pipeline_mode<synchronous>, transform_indices = @transform_3, window_bounds = array<i64: 1, 32>}, {pipeline_mode = #tpu.pipeline_mode<synchronous>, transform_indices = @transform_4, window_bounds = array<i64: 32, 64>}, {pipeline_mode = #tpu.pipeline_mode<synchronous>, transform_indices = @transform_5, window_bounds = array<i64: 1, 64>}, {pipeline_mode = #tpu.pipeline_mode<synchronous>, transform_indices = @transform_6, window_bounds = array<i64: 32, 32>}, {pipeline_mode = #tpu.pipeline_mode<synchronous>, transform_indices = @transform_7, window_bounds = array<i64: 1, 32>}, {transform_indices = @transform_8, window_bounds = array<i64: 2, 8, 32>}, {transform_indices = @transform_9, window_bounds = array<i64: 2, 8, 8>}]} {
    %c0 = arith.constant 0 : index
    %c0_0 = arith.constant 0 : index
    %c0_1 = arith.constant 0 : index
    %0 = vector.load %arg1[%c0, %c0_0, %c0_1] : memref<2x8x32xf32, #tpu.memory_space<vmem>>, vector<2x8x32xf32>
    %1 = vector.shape_cast %0 : vector<2x8x32xf32> to vector<16x32xf32>
    %c0_2 = arith.constant 0 : index
    %c0_3 = arith.constant 0 : index
    %c0_4 = arith.constant 0 : index
    %2 = vector.load %arg2[%c0_2, %c0_3, %c0_4] : memref<2x8x32xf32, #tpu.memory_space<vmem>>, vector<2x8x32xf32>
    %3 = vector.shape_cast %2 : vector<2x8x32xf32> to vector<16x32xf32>
    %c0_5 = arith.constant 0 : index
    %c0_6 = arith.constant 0 : index
    %4 = vector.load %arg3[%c0_5, %c0_6] : memref<32x32xf32, #tpu.memory_space<vmem>>, vector<32x32xf32>
    %cst = arith.constant dense<0.000000e+00> : vector<16x32xf32>
    %5 = tpu.matmul %1, %4, %cst {dimension_numbers = #tpu.dot_dimension_numbers<[1], [0], [0], [1], [0, 0, 1, 1], [], []>} : vector<16x32xf32>, vector<32x32xf32>, vector<16x32xf32> -> vector<16x32xf32>
    %c0_7 = arith.constant 0 : index
    %c0_8 = arith.constant 0 : index
    %6 = vector.load %arg4[%c0_7, %c0_8] : memref<1x32xf32, #tpu.memory_space<vmem>>, vector<1x32xf32>
    %7 = vector.broadcast %6 : vector<1x32xf32> to vector<16x32xf32>
    %8 = arith.addf %5, %7 : vector<16x32xf32>
    %c0_9 = arith.constant 0 : index
    %c0_10 = arith.constant 0 : index
    %9 = vector.load %arg5[%c0_9, %c0_10] : memref<32x64xf32, #tpu.memory_space<vmem>>, vector<32x64xf32>
    %cst_11 = arith.constant dense<0.000000e+00> : vector<16x64xf32>
    %10 = tpu.matmul %3, %9, %cst_11 {dimension_numbers = #tpu.dot_dimension_numbers<[1], [0], [0], [1], [0, 0, 1, 1], [], []>} : vector<16x32xf32>, vector<32x64xf32>, vector<16x64xf32> -> vector<16x64xf32>
    %c0_12 = arith.constant 0 : index
    %c0_13 = arith.constant 0 : index
    %11 = vector.load %arg6[%c0_12, %c0_13] : memref<1x64xf32, #tpu.memory_space<vmem>>, vector<1x64xf32>
    %12 = vector.broadcast %11 : vector<1x64xf32> to vector<16x64xf32>
    %13 = arith.addf %10, %12 : vector<16x64xf32>
    %14 = vector.shape_cast %8 : vector<16x32xf32> to vector<2x8x32xf32>
    %15 = vector.extract_strided_slice %13 {offsets = [0, 0], sizes = [16, 32], strides = [1, 1]} : vector<16x64xf32> to vector<16x32xf32>
    %16 = vector.shape_cast %15 : vector<16x32xf32> to vector<2x8x32xf32>
    %17 = vector.extract_strided_slice %13 {offsets = [0, 32], sizes = [16, 32], strides = [1, 1]} : vector<16x64xf32> to vector<16x32xf32>
    %18 = vector.shape_cast %17 : vector<16x32xf32> to vector<2x8x32xf32>
    %cst_14 = arith.constant dense<0.000000e+00> : vector<2x8x8xf32>
    %19 = tpu.matmul %14, %16, %cst_14 {dimension_numbers = #tpu.dot_dimension_numbers<[2], [2], [1], [1], [0, 0, 0, 1, 1, 1], [0], [0]>} : vector<2x8x32xf32>, vector<2x8x32xf32>, vector<2x8x8xf32> -> vector<2x8x8xf32>
    %cst_15 = arith.constant dense<0xFF800000> : vector<2x8xf32>
    %20 = vector.multi_reduction <maximumf>, %19, %cst_15 [2] : vector<2x8x8xf32> to vector<2x8xf32>
    %21 = vector.shape_cast %20 : vector<2x8xf32> to vector<2x8x1xf32>
    %22 = vector.broadcast %21 : vector<2x8x1xf32> to vector<2x8x8xf32>
    %23 = arith.subf %19, %22 : vector<2x8x8xf32>
    %24 = math.exp %23 : vector<2x8x8xf32>
    %cst_16 = arith.constant dense<0.000000e+00> : vector<2x8xf32>
    %25 = vector.multi_reduction <add>, %24, %cst_16 [2] : vector<2x8x8xf32> to vector<2x8xf32>
    %26 = vector.shape_cast %25 : vector<2x8xf32> to vector<2x8x1xf32>
    %27 = tpu.reciprocal %26 : vector<2x8x1xf32> -> vector<2x8x1xf32>
    %28 = vector.broadcast %27 : vector<2x8x1xf32> to vector<2x8x8xf32>
    %29 = arith.mulf %24, %28 : vector<2x8x8xf32>
    %cst_17 = arith.constant dense<0.000000e+00> : vector<2x8x32xf32>
    %30 = tpu.matmul %29, %18, %cst_17 {dimension_numbers = #tpu.dot_dimension_numbers<[2], [1], [1], [2], [0, 0, 0, 1, 1, 2], [0], [0]>} : vector<2x8x8xf32>, vector<2x8x32xf32>, vector<2x8x32xf32> -> vector<2x8x32xf32>
    %31 = vector.shape_cast %30 : vector<2x8x32xf32> to vector<16x32xf32>
    %c0_18 = arith.constant 0 : index
    %c0_19 = arith.constant 0 : index
    %32 = vector.load %arg7[%c0_18, %c0_19] : memref<32x32xf32, #tpu.memory_space<vmem>>, vector<32x32xf32>
    %cst_20 = arith.constant dense<0.000000e+00> : vector<16x32xf32>
    %33 = tpu.matmul %31, %32, %cst_20 {dimension_numbers = #tpu.dot_dimension_numbers<[1], [0], [0], [1], [0, 0, 1, 1], [], []>} : vector<16x32xf32>, vector<32x32xf32>, vector<16x32xf32> -> vector<16x32xf32>
    %c0_21 = arith.constant 0 : index
    %c0_22 = arith.constant 0 : index
    %34 = vector.load %arg8[%c0_21, %c0_22] : memref<1x32xf32, #tpu.memory_space<vmem>>, vector<1x32xf32>
    %35 = vector.broadcast %34 : vector<1x32xf32> to vector<16x32xf32>
    %36 = arith.addf %33, %35 : vector<16x32xf32>
    %37 = math.tanh %36 : vector<16x32xf32>
    %38 = vector.shape_cast %37 : vector<16x32xf32> to vector<2x8x32xf32>
    %c0_23 = arith.constant 0 : index
    %c0_24 = arith.constant 0 : index
    %c0_25 = arith.constant 0 : index
    %39 = vector.load %arg9[%c0_23, %c0_24, %c0_25] : memref<2x8x32xf32, #tpu.memory_space<vmem>>, vector<2x8x32xf32>
    tpu.vector_store %arg9[%c0_23, %c0_24, %c0_25], %38 {strides = array<i32>} : memref<2x8x32xf32, #tpu.memory_space<vmem>>, vector<2x8x32xf32>,
    %c0_26 = arith.constant 0 : index
    %c0_27 = arith.constant 0 : index
    %c0_28 = arith.constant 0 : index
    %40 = vector.load %arg10[%c0_26, %c0_27, %c0_28] : memref<2x8x8xf32, #tpu.memory_space<vmem>>, vector<2x8x8xf32>
    tpu.vector_store %arg10[%c0_26, %c0_27, %c0_28], %29 {strides = array<i32>} : memref<2x8x8xf32, #tpu.memory_space<vmem>>, vector<2x8x8xf32>,
    return
  }
  func.func @transform_0(%arg0: i32) -> (i32, i32, i32) {
    %c0_i32 = arith.constant 0 : i32
    %c0_i32_0 = arith.constant 0 : i32
    %c0_i32_1 = arith.constant 0 : i32
    return %arg0, %c0_i32, %c0_i32_0 : i32, i32, i32
  }
  func.func @transform_1(%arg0: i32) -> (i32, i32, i32) {
    %c0_i32 = arith.constant 0 : i32
    %c0_i32_0 = arith.constant 0 : i32
    %c0_i32_1 = arith.constant 0 : i32
    return %arg0, %c0_i32, %c0_i32_0 : i32, i32, i32
  }
  func.func @transform_2(%arg0: i32) -> (i32, i32) {
    %c0_i32 = arith.constant 0 : i32
    %c0_i32_0 = arith.constant 0 : i32
    %c0_i32_1 = arith.constant 0 : i32
    return %c0_i32, %c0_i32_0 : i32, i32
  }
  func.func @transform_3(%arg0: i32) -> (i32, i32) {
    %c0_i32 = arith.constant 0 : i32
    %c0_i32_0 = arith.constant 0 : i32
    %c0_i32_1 = arith.constant 0 : i32
    return %c0_i32, %c0_i32_0 : i32, i32
  }
  func.func @transform_4(%arg0: i32) -> (i32, i32) {
    %c0_i32 = arith.constant 0 : i32
    %c0_i32_0 = arith.constant 0 : i32
    %c0_i32_1 = arith.constant 0 : i32
    return %c0_i32, %c0_i32_0 : i32, i32
  }
  func.func @transform_5(%arg0: i32) -> (i32, i32) {
    %c0_i32 = arith.constant 0 : i32
    %c0_i32_0 = arith.constant 0 : i32
    %c0_i32_1 = arith.constant 0 : i32
    return %c0_i32, %c0_i32_0 : i32, i32
  }
  func.func @transform_6(%arg0: i32) -> (i32, i32) {
    %c0_i32 = arith.constant 0 : i32
    %c0_i32_0 = arith.constant 0 : i32
    %c0_i32_1 = arith.constant 0 : i32
    return %c0_i32, %c0_i32_0 : i32, i32
  }
  func.func @transform_7(%arg0: i32) -> (i32, i32) {
    %c0_i32 = arith.constant 0 : i32
    %c0_i32_0 = arith.constant 0 : i32
    %c0_i32_1 = arith.constant 0 : i32
    return %c0_i32, %c0_i32_0 : i32, i32
  }
  func.func @transform_8(%arg0: i32) -> (i32, i32, i32) {
    %c0_i32 = arith.constant 0 : i32
    %c0_i32_0 = arith.constant 0 : i32
    %c0_i32_1 = arith.constant 0 : i32
    return %arg0, %c0_i32, %c0_i32_0 : i32, i32, i32
  }
  func.func @transform_9(%arg0: i32) -> (i32, i32, i32) {
    %c0_i32 = arith.constant 0 : i32
    %c0_i32_0 = arith.constant 0 : i32
    %c0_i32_1 = arith.constant 0 : i32
    return %arg0, %c0_i32, %c0_i32_0 : i32, i32, i32
  }
}

</mosaic_0001>

<llo_original>
// kernel: tpu_custom_call.1
$region0: #{tpu_custom_call.1}
  #allocation0 [shape = 'u32[]', space=smem, size = 0x4, offset = 0x4, fixed_abs, tag = 'smem constant byte address 0x4 - core index']
  #allocation1 [shape = 'u32[144,128]{1,0:T(1,128)}', space=vmem, size = 0x12000, scoped, tag = 'internal scratch']
  %s0 = inlined_call_operand.hbm [shape: f32[2,8,32], index: 0, kind: input, shape index: {}]
  %s1 = inlined_call_operand.hbm [shape: f32[2,8,32], index: 1, kind: input, shape index: {}]
  %s2 = inlined_call_operand.hbm [shape: f32[32,32], index: 2, kind: input, shape index: {}]
  %s3 = inlined_call_operand.vmem [shape: f32[1,32], index: 3, kind: input, shape index: {}]
  %s4 = inlined_call_operand.hbm [shape: f32[32,64], index: 4, kind: input, shape index: {}]
  %s5 = inlined_call_operand.vmem [shape: f32[1,64], index: 5, kind: input, shape index: {}]
  %s6 = inlined_call_operand.hbm [shape: f32[32,32], index: 6, kind: input, shape index: {}]
  %s7 = inlined_call_operand.vmem [shape: f32[1,32], index: 7, kind: input, shape index: {}]
  %s8 = inlined_call_operand.hbm [shape: f32[2,8,32], index: 8, kind: output, shape index: {0}]
  %s9 = inlined_call_operand.hbm [shape: f32[2,8,8], index: 9, kind: output, shape index: {1}]
  %10 = xla_tuple %s8, %s9
  %s11 = sld [smem:[#allocation0]]
  $region70: #{tpu_custom_call.1} parent=0
    _
  %s13 = ssub.s32 1, %s11
  %s14 = scalar_select 0, %s13, %s11
  $region1: #{tpu_custom_call.1} parent=0
    #allocation2 [shape = 'u8[8192]{0}', space=vmem, size = 0x2000, scoped, tag = 'input window, operand 0, single buffered']
    #allocation3 [shape = 's32[1]{0}', space=sflag, size = 0x4, scoped, tag = 'scoped memory for tpu_custom_call.1']
    #allocation4 [shape = 's32[1]{0}', space=sflag, size = 0x4, scoped, tag = 'scoped memory for tpu_custom_call.1']
    #allocation5 [shape = 'u8[8192]{0}', space=vmem, size = 0x2000, scoped, tag = 'input window, operand 1, single buffered']
    #allocation6 [shape = 's32[1]{0}', space=sflag, size = 0x4, scoped, tag = 'scoped memory for tpu_custom_call.1']
    #allocation7 [shape = 'u8[16384]{0}', space=vmem, size = 0x4000, scoped, tag = 'input window, operand 2, single buffered']
    #allocation8 [shape = 'u8[16384]{0}', space=vmem, size = 0x4000, scoped, tag = 'input window, operand 4, single buffered']
    #allocation9 [shape = 's32[1]{0}', space=sflag, size = 0x4, scoped, tag = 'scoped memory for tpu_custom_call.1']
    #allocation10 [shape = 'u8[16384]{0}', space=vmem, size = 0x4000, scoped, tag = 'input window, operand 6, single buffered']
    #allocation11 [shape = 'u8[8192]{0}', space=vmem, size = 0x2000, scoped, tag = 'output window, operand 0, single buffered']
    #allocation12 [shape = 'u8[8192]{0}', space=vmem, size = 0x2000, scoped, tag = 'output window, operand 1, single buffered']
    #allocation13 [shape = 's32[1]{0}', space=sflag, size = 0x4, scoped, tag = 'scoped memory for tpu_custom_call.1']
    %15 = vsyncpa [#allocation3], 0
    %16 = vsyncpa [#allocation6], 0
    %17 = vsyncpa [#allocation9], 0
    %18 = vsyncpa [#allocation4], 0
    %19 = vsyncpa [#allocation13], 0
    // Predicated region
    $region2: #{tpu_custom_call.1} parent=1 // pred_check
      _
    $region3: #{tpu_custom_call.1} parent=1 // pred_check_branch
      %21 = sbr.rel (0) target = $region5
    $region4: #{tpu_custom_call.1} parent=1 // pred_region
      %s23 = ssub.s32 256, 256
      %24 = vsyncadd [#allocation3], %s23
      %s25 = sshll.u32 [#allocation2], 4
      %s26 = int_to_ptr.vmem [resolvable:$true] %s25
      %31 = dma.hbm_to_vmem [thread:$0]  %s0, 256, %s26, [#allocation3], 128, 128, 8
    $region5: #{tpu_custom_call.1} parent=1 // pred_fallthru
      _
    // Predicated region
    $region6: #{tpu_custom_call.1} parent=1 // pred_check
      _
    $region7: #{tpu_custom_call.1} parent=1 // pred_check_branch
      %33 = sbr.rel (0) target = $region9
    $region8: #{tpu_custom_call.1} parent=1 // pred_region
      %s35 = ssub.s32 256, 256
      %36 = vsyncadd [#allocation6], %s35
      %s37 = sshll.u32 [#allocation5], 4
      %s38 = int_to_ptr.vmem [resolvable:$true] %s37
      %43 = dma.hbm_to_vmem [thread:$0]  %s1, 256, %s38, [#allocation6], 128, 128, 8
    $region9: #{tpu_custom_call.1} parent=1 // pred_fallthru
      _
    // Predicated region
    $region10: #{tpu_custom_call.1} parent=1 // pred_check
      _
    $region11: #{tpu_custom_call.1} parent=1 // pred_check_branch
      %45 = sbr.rel (0) target = $region13
    $region12: #{tpu_custom_call.1} parent=1 // pred_region
      %s47 = ssub.s32 512, 512
      %48 = vsyncadd [#allocation6], %s47
      %s49 = sshll.u32 [#allocation7], 4
      %s50 = int_to_ptr.vmem [resolvable:$true] %s49
      %55 = dma.hbm_to_vmem [thread:$0]  %s2, 512, %s50, [#allocation6], 128, 128, 8
    $region13: #{tpu_custom_call.1} parent=1 // pred_fallthru
      _
    // Predicated region
    $region14: #{tpu_custom_call.1} parent=1 // pred_check
      _
    $region15: #{tpu_custom_call.1} parent=1 // pred_check_branch
      %57 = sbr.rel (0) target = $region17
    $region16: #{tpu_custom_call.1} parent=1 // pred_region
      _
    $region17: #{tpu_custom_call.1} parent=1 // pred_fallthru
      _
    // Predicated region
    $region18: #{tpu_custom_call.1} parent=1 // pred_check
      _
    $region19: #{tpu_custom_call.1} parent=1 // pred_check_branch
      %59 = sbr.rel (0) target = $region21
    $region20: #{tpu_custom_call.1} parent=1 // pred_region
      %s61 = ssub.s32 512, 512
      %62 = vsyncadd [#allocation9], %s61
      %s63 = sshll.u32 [#allocation8], 4
      %s64 = int_to_ptr.vmem [resolvable:$true] %s63
      %69 = dma.hbm_to_vmem [thread:$0]  %s4, 512, %s64, [#allocation9], 128, 128, 8
    $region21: #{tpu_custom_call.1} parent=1 // pred_fallthru
      _
    // Predicated region
    $region22: #{tpu_custom_call.1} parent=1 // pred_check
      _
    $region23: #{tpu_custom_call.1} parent=1 // pred_check_branch
      %71 = sbr.rel (0) target = $region25
    $region24: #{tpu_custom_call.1} parent=1 // pred_region
      _
    $region25: #{tpu_custom_call.1} parent=1 // pred_fallthru
      _
    // Predicated region
    $region26: #{tpu_custom_call.1} parent=1 // pred_check
      _
    $region27: #{tpu_custom_call.1} parent=1 // pred_check_branch
      %73 = sbr.rel (0) target = $region29
    $region28: #{tpu_custom_call.1} parent=1 // pred_region
      %s75 = ssub.s32 512, 512
      %76 = vsyncadd [#allocation9], %s75
      %s77 = sshll.u32 [#allocation10], 4
      %s78 = int_to_ptr.vmem [resolvable:$true] %s77
      %83 = dma.hbm_to_vmem [thread:$0]  %s6, 512, %s78, [#allocation9], 128, 128, 8
    $region29: #{tpu_custom_call.1} parent=1 // pred_fallthru
      _
    // Predicated region
    $region30: #{tpu_custom_call.1} parent=1 // pred_check
      _
    $region31: #{tpu_custom_call.1} parent=1 // pred_check_branch
      %85 = sbr.rel (0) target = $region33
    $region32: #{tpu_custom_call.1} parent=1 // pred_region
      _
    $region33: #{tpu_custom_call.1} parent=1 // pred_fallthru
      _
    // Predicated region
    $region34: #{tpu_custom_call.1} parent=1 // pred_check
      _
    $region35: #{tpu_custom_call.1} parent=1 // pred_check_branch
      %87 = sbr.rel (0) target = $region37
    $region36: #{tpu_custom_call.1} parent=1 // pred_region
      %88 = dma.done [#allocation3], 256
    $region37: #{tpu_custom_call.1} parent=1 // pred_fallthru
      _
    // Predicated region
    $region38: #{tpu_custom_call.1} parent=1 // pred_check
      _
    $region39: #{tpu_custom_call.1} parent=1 // pred_check_branch
      %90 = sbr.rel (0) target = $region41
    $region40: #{tpu_custom_call.1} parent=1 // pred_region
      %91 = dma.done [#allocation6], 256
    $region41: #{tpu_custom_call.1} parent=1 // pred_fallthru
      _
    // Predicated region
    $region42: #{tpu_custom_call.1} parent=1 // pred_check
      _
    $region43: #{tpu_custom_call.1} parent=1 // pred_check_branch
      %93 = sbr.rel (0) target = $region45
    $region44: #{tpu_custom_call.1} parent=1 // pred_region
      %94 = dma.done [#allocation6], 512
    $region45: #{tpu_custom_call.1} parent=1 // pred_fallthru
      _
    // Predicated region
    $region46: #{tpu_custom_call.1} parent=1 // pred_check
      _
    $region47: #{tpu_custom_call.1} parent=1 // pred_check_branch
      %96 = sbr.rel (0) target = $region49
    $region48: #{tpu_custom_call.1} parent=1 // pred_region
      %97 = dma.done [#allocation9], 512
    $region49: #{tpu_custom_call.1} parent=1 // pred_fallthru
      _
    // Predicated region
    $region50: #{tpu_custom_call.1} parent=1 // pred_check
      _
    $region51: #{tpu_custom_call.1} parent=1 // pred_check_branch
      %99 = sbr.rel (0) target = $region53
    $region52: #{tpu_custom_call.1} parent=1 // pred_region
      %100 = dma.done [#allocation9], 512
    $region53: #{tpu_custom_call.1} parent=1 // pred_fallthru
      _
    %v101 = vld [vmem:[#allocation2] sm:$0xff]
    %v102 = vld [vmem:[#allocation2 + $0x8] sm:$0xff]
    %v103 = vld [vmem:[#allocation5] sm:$0xff]
    %v104 = vld [vmem:[#allocation5 + $0x8] sm:$0xff]
    %v105 = vld [vmem:[#allocation7] sm:$0xff]
    %v106 = vld [vmem:[#allocation7 + $0x8] sm:$0xff]
    %v107 = vld [vmem:[#allocation7 + $0x10] sm:$0xff]
    %v108 = vld [vmem:[#allocation7 + $0x18] sm:$0xff]
    %v109 = vld [vmem:[%s3] sm:$0x1]
    %v111 = vlaneseq
    %v112 = vshrl.u32 %v111, 7
    %v113 = vsub.s32 0, %v112
    %v114 = vrot.slane %v109, %v113
    %vm116 = vcmask 261120
    %v118 = vsel %vm116, %v101, 0
    %v121 = vsel %vm116, %v102, 0
    %123 = vmatprep.subr.mxu0 0.0
    %124 = vmatpush1.msra.mxu0 %v105
    %125 = vmatprep.subr.mxu0 0.0
    %126 = vmatpush1.msra.mxu0 %v106
    %127 = vmatprep.subr.mxu0 0.0
    %128 = vmatpush1.msra.mxu0 %v107
    %129 = vmatprep.subr.mxu0 0.0
    %130 = vmatpush1.msra.mxu0 %v108
    %131 = vmatprep.subr.mxu0 0.0
    %132 = vmatpush1.msra.mxu0 0.0
    %133 = vmatprep.subr.mxu0 0.0
    %134 = vmatpush1.msra.mxu0 0.0
    %135 = vmatprep.subr.mxu0 0.0
    %136 = vmatpush1.msra.mxu0 0.0
    %137 = vmatprep.subr.mxu0 0.0
    %138 = vmatpush1.msra.mxu0 0.0
    %139 = vmatprep.subr.mxu0 0.0
    %140 = vmatpush1.msra.mxu0 0.0
    %141 = vmatprep.subr.mxu0 0.0
    %142 = vmatpush1.msra.mxu0 0.0
    %143 = vmatprep.subr.mxu0 0.0
    %144 = vmatpush1.msra.mxu0 0.0
    %145 = vmatprep.subr.mxu0 0.0
    %146 = vmatpush1.msra.mxu0 0.0
    %147 = vmatprep.subr.mxu0 0.0
    %148 = vmatpush1.msra.mxu0 0.0
    %149 = vmatprep.subr.mxu0 0.0
    %150 = vmatpush1.msra.mxu0 0.0
    %151 = vmatprep.subr.mxu0 0.0
    %152 = vmatpush1.msra.mxu0 0.0
    %153 = vmatprep.subr.mxu0 0.0
    %154 = vmatpush1.msra.mxu0 0.0
    %155 = vmatprep.subr.mxu0 0.0
    %156 = vmatpush1.msra.mxu0 0.0
    %157 = vmatprep.subr.mxu0 0.0
    %158 = vmatpush1.msra.mxu0 0.0
    %159 = vmatprep.subr.mxu0 0.0
    %160 = vmatpush1.msra.mxu0 0.0
    %161 = vmatprep.subr.mxu0 0.0
    %162 = vmatpush1.msra.mxu0 0.0
    %163 = vmatprep.subr.mxu0 0.0
    %164 = vmatpush1.msra.mxu0 0.0
    %165 = vmatprep.subr.mxu0 0.0
    %166 = vmatpush1.msra.mxu0 0.0
    %167 = vmatprep.subr.mxu0 0.0
    %168 = vmatpush1.msra.mxu0 0.0
    %169 = vmatprep.subr.mxu0 0.0
    %170 = vmatpush1.msra.mxu0 0.0
    %171 = vmatprep.subr.mxu0 0.0
    %172 = vmatpush1.msra.mxu0 0.0
    %173 = vmatprep.subr.mxu0 0.0
    %174 = vmatpush1.msra.mxu0 0.0
    %175 = vmatprep.subr.mxu0 0.0
    %176 = vmatpush1.msra.mxu0 0.0
    %177 = vmatprep.subr.mxu0 0.0
    %178 = vmatpush1.msra.mxu0 0.0
    %179 = vmatprep.subr.mxu0 0.0
    %180 = vmatpush1.msra.mxu0 0.0
    %181 = vmatprep.subr.mxu0 0.0
    %182 = vmatpush1.msra.mxu0 0.0
    %183 = vmatprep.subr.mxu0 0.0
    %184 = vmatpush1.msra.mxu0 0.0
    %185 = vmatprep.subr.mxu0 0.0
    %186 = vmatpush1.msra.mxu0 0.0
    %187 = vmatprep.mubr.f32.mxu0 0.0
    %188 = vmatmul.mubr.f32.gmra.mrb[0].mxu0 %v118
    %v189 = vpop.f32.mrb[0].mxu0
    %v190 = vadd.f32 %v114, %v189
    %v191 = vpop.f32.mrb[0].mxu0
    %192 = vmatprep.mubr.f32.mxu0 0.0
    %193 = vmatmul.mubr.f32.gmra.mrb[0].mxu0 %v121
    %v194 = vpop.f32.mrb[0].mxu0
    %v195 = vadd.f32 %v114, %v194
    %v196 = vpop.f32.mrb[0].mxu0
    %197 = vdwg.mxu0
    %v198 = vld [vmem:[#allocation8] sm:$0xff]
    %v199 = vld [vmem:[#allocation8 + $0x8] sm:$0xff]
    %v200 = vld [vmem:[#allocation8 + $0x10] sm:$0xff]
    %v201 = vld [vmem:[#allocation8 + $0x18] sm:$0xff]
    %v202 = vld [vmem:[%s5] sm:$0x1]
    %v204 = vlaneseq
    %v205 = vshrl.u32 %v204, 7
    %v206 = vsub.s32 0, %v205
    %v207 = vrot.slane %v202, %v206
    %v210 = vsel %vm116, %v103, 0
    %v213 = vsel %vm116, %v104, 0
    %215 = vmatprep.subr.mxu0 0.0
    %216 = vmatpush1.msra.mxu0 %v198
    %217 = vmatprep.subr.mxu0 0.0
    %218 = vmatpush1.msra.mxu0 %v199
    %219 = vmatprep.subr.mxu0 0.0
    %220 = vmatpush1.msra.mxu0 %v200
    %221 = vmatprep.subr.mxu0 0.0
    %222 = vmatpush1.msra.mxu0 %v201
    %223 = vmatprep.subr.mxu0 0.0
    %224 = vmatpush1.msra.mxu0 0.0
    %225 = vmatprep.subr.mxu0 0.0
    %226 = vmatpush1.msra.mxu0 0.0
    %227 = vmatprep.subr.mxu0 0.0
    %228 = vmatpush1.msra.mxu0 0.0
    %229 = vmatprep.subr.mxu0 0.0
    %230 = vmatpush1.msra.mxu0 0.0
    %231 = vmatprep.subr.mxu0 0.0
    %232 = vmatpush1.msra.mxu0 0.0
    %233 = vmatprep.subr.mxu0 0.0
    %234 = vmatpush1.msra.mxu0 0.0
    %235 = vmatprep.subr.mxu0 0.0
    %236 = vmatpush1.msra.mxu0 0.0
    %237 = vmatprep.subr.mxu0 0.0
    %238 = vmatpush1.msra.mxu0 0.0
    %239 = vmatprep.subr.mxu0 0.0
    %240 = vmatpush1.msra.mxu0 0.0
    %241 = vmatprep.subr.mxu0 0.0
    %242 = vmatpush1.msra.mxu0 0.0
    %243 = vmatprep.subr.mxu0 0.0
    %244 = vmatpush1.msra.mxu0 0.0
    %245 = vmatprep.subr.mxu0 0.0
    %246 = vmatpush1.msra.mxu0 0.0
    %247 = vmatprep.subr.mxu0 0.0
    %248 = vmatpush1.msra.mxu0 0.0
    %249 = vmatprep.subr.mxu0 0.0
    %250 = vmatpush1.msra.mxu0 0.0
    %251 = vmatprep.subr.mxu0 0.0
    %252 = vmatpush1.msra.mxu0 0.0
    %253 = vmatprep.subr.mxu0 0.0
    %254 = vmatpush1.msra.mxu0 0.0
    %255 = vmatprep.subr.mxu0 0.0
    %256 = vmatpush1.msra.mxu0 0.0
    %257 = vmatprep.subr.mxu0 0.0
    %258 = vmatpush1.msra.mxu0 0.0
    %259 = vmatprep.subr.mxu0 0.0
    %260 = vmatpush1.msra.mxu0 0.0
    %261 = vmatprep.subr.mxu0 0.0
    %262 = vmatpush1.msra.mxu0 0.0
    %263 = vmatprep.subr.mxu0 0.0
    %264 = vmatpush1.msra.mxu0 0.0
    %265 = vmatprep.subr.mxu0 0.0
    %266 = vmatpush1.msra.mxu0 0.0
    %267 = vmatprep.subr.mxu0 0.0
    %268 = vmatpush1.msra.mxu0 0.0
    %269 = vmatprep.subr.mxu0 0.0
    %270 = vmatpush1.msra.mxu0 0.0
    %271 = vmatprep.subr.mxu0 0.0
    %272 = vmatpush1.msra.mxu0 0.0
    %273 = vmatprep.subr.mxu0 0.0
    %274 = vmatpush1.msra.mxu0 0.0
    %275 = vmatprep.subr.mxu0 0.0
    %276 = vmatpush1.msra.mxu0 0.0
    %277 = vmatprep.subr.mxu0 0.0
    %278 = vmatpush1.msra.mxu0 0.0
    %279 = vmatprep.mubr.f32.mxu0 0.0
    %280 = vmatmul.mubr.f32.gmra.mrb[0].mxu0 %v210
    %v281 = vpop.f32.mrb[0].mxu0
    %v282 = vadd.f32 %v207, %v281
    %v283 = vpop.f32.mrb[0].mxu0
    %284 = vmatprep.mubr.f32.mxu0 0.0
    %285 = vmatmul.mubr.f32.gmra.mrb[0].mxu0 %v213
    %v286 = vpop.f32.mrb[0].mxu0
    %v287 = vadd.f32 %v207, %v286
    %v288 = vpop.f32.mrb[0].mxu0
    %289 = vdwg.mxu0
    %v291 = vsel %vm116, %v190, 0
    %v294 = vsel %vm116, %v282, 0
    %296 = vmatprep.subr.mxu0 0.0
    %297 = vmatpush1.xpose.msra.mxu0 %v294
    %298 = vmatprep.subr.mxu0 0.0
    %299 = vmatpush1.xpose.msra.mxu0 0.0
    %300 = vmatprep.subr.mxu0 0.0
    %301 = vmatpush1.xpose.msra.mxu0 0.0
    %302 = vmatprep.subr.mxu0 0.0
    %303 = vmatpush1.xpose.msra.mxu0 0.0
    %304 = vmatprep.subr.mxu0 0.0
    %305 = vmatpush1.xpose.msra.mxu0 0.0
    %306 = vmatprep.subr.mxu0 0.0
    %307 = vmatpush1.xpose.msra.mxu0 0.0
    %308 = vmatprep.subr.mxu0 0.0
    %309 = vmatpush1.xpose.msra.mxu0 0.0
    %310 = vmatprep.subr.mxu0 0.0
    %311 = vmatpush1.xpose.msra.mxu0 0.0
    %312 = vmatprep.subr.mxu0 0.0
    %313 = vmatpush1.xpose.msra.mxu0 0.0
    %314 = vmatprep.subr.mxu0 0.0
    %315 = vmatpush1.xpose.msra.mxu0 0.0
    %316 = vmatprep.subr.mxu0 0.0
    %317 = vmatpush1.xpose.msra.mxu0 0.0
    %318 = vmatprep.subr.mxu0 0.0
    %319 = vmatpush1.xpose.msra.mxu0 0.0
    %320 = vmatprep.subr.mxu0 0.0
    %321 = vmatpush1.xpose.msra.mxu0 0.0
    %322 = vmatprep.subr.mxu0 0.0
    %323 = vmatpush1.xpose.msra.mxu0 0.0
    %324 = vmatprep.subr.mxu0 0.0
    %325 = vmatpush1.xpose.msra.mxu0 0.0
    %326 = vmatprep.subr.mxu0 0.0
    %327 = vmatpush1.xpose.msra.mxu0 0.0
    %328 = vmatprep.subr.mxu0 0.0
    %329 = vmatpush1.xpose.msra.mxu0 0.0
    %330 = vmatprep.subr.mxu0 0.0
    %331 = vmatpush1.xpose.msra.mxu0 0.0
    %332 = vmatprep.subr.mxu0 0.0
    %333 = vmatpush1.xpose.msra.mxu0 0.0
    %334 = vmatprep.subr.mxu0 0.0
    %335 = vmatpush1.xpose.msra.mxu0 0.0
    %336 = vmatprep.subr.mxu0 0.0
    %337 = vmatpush1.xpose.msra.mxu0 0.0
    %338 = vmatprep.subr.mxu0 0.0
    %339 = vmatpush1.xpose.msra.mxu0 0.0
    %340 = vmatprep.subr.mxu0 0.0
    %341 = vmatpush1.xpose.msra.mxu0 0.0
    %342 = vmatprep.subr.mxu0 0.0
    %343 = vmatpush1.xpose.msra.mxu0 0.0
    %344 = vmatprep.subr.mxu0 0.0
    %345 = vmatpush1.xpose.msra.mxu0 0.0
    %346 = vmatprep.subr.mxu0 0.0
    %347 = vmatpush1.xpose.msra.mxu0 0.0
    %348 = vmatprep.subr.mxu0 0.0
    %349 = vmatpush1.xpose.msra.mxu0 0.0
    %350 = vmatprep.subr.mxu0 0.0
    %351 = vmatpush1.xpose.msra.mxu0 0.0
    %352 = vmatprep.subr.mxu0 0.0
    %353 = vmatpush1.xpose.msra.mxu0 0.0
    %354 = vmatprep.subr.mxu0 0.0
    %355 = vmatpush1.xpose.msra.mxu0 0.0
    %356 = vmatprep.subr.mxu0 0.0
    %357 = vmatpush1.xpose.msra.mxu0 0.0
    %358 = vmatprep.subr.mxu0 0.0
    %359 = vmatpush1.xpose.msra.mxu0 0.0
    %360 = vmatprep.mubr.f32.mxu0 0.0
    %361 = vmatmul.mubr.f32.gmra.mrb[0].mxu0 %v291
    %v362 = vpop.f32.mrb[0].mxu0
    %v363 = vadd.f32 0.0, %v362
    %v364 = vpop.f32.mrb[0].mxu0
    %365 = vdwg.mxu0
    %v367 = vsel %vm116, %v195, 0
    %v370 = vsel %vm116, %v287, 0
    %372 = vmatprep.subr.mxu0 0.0
    %373 = vmatpush1.xpose.msra.mxu0 %v370
    %374 = vmatprep.subr.mxu0 0.0
    %375 = vmatpush1.xpose.msra.mxu0 0.0
    %376 = vmatprep.subr.mxu0 0.0
    %377 = vmatpush1.xpose.msra.mxu0 0.0
    %378 = vmatprep.subr.mxu0 0.0
    %379 = vmatpush1.xpose.msra.mxu0 0.0
    %380 = vmatprep.subr.mxu0 0.0
    %381 = vmatpush1.xpose.msra.mxu0 0.0
    %382 = vmatprep.subr.mxu0 0.0
    %383 = vmatpush1.xpose.msra.mxu0 0.0
    %384 = vmatprep.subr.mxu0 0.0
    %385 = vmatpush1.xpose.msra.mxu0 0.0
    %386 = vmatprep.subr.mxu0 0.0
    %387 = vmatpush1.xpose.msra.mxu0 0.0
    %388 = vmatprep.subr.mxu0 0.0
    %389 = vmatpush1.xpose.msra.mxu0 0.0
    %390 = vmatprep.subr.mxu0 0.0
    %391 = vmatpush1.xpose.msra.mxu0 0.0
    %392 = vmatprep.subr.mxu0 0.0
    %393 = vmatpush1.xpose.msra.mxu0 0.0
    %394 = vmatprep.subr.mxu0 0.0
    %395 = vmatpush1.xpose.msra.mxu0 0.0
    %396 = vmatprep.subr.mxu0 0.0
    %397 = vmatpush1.xpose.msra.mxu0 0.0
    %398 = vmatprep.subr.mxu0 0.0
    %399 = vmatpush1.xpose.msra.mxu0 0.0
    %400 = vmatprep.subr.mxu0 0.0
    %401 = vmatpush1.xpose.msra.mxu0 0.0
    %402 = vmatprep.subr.mxu0 0.0
    %403 = vmatpush1.xpose.msra.mxu0 0.0
    %404 = vmatprep.subr.mxu0 0.0
    %405 = vmatpush1.xpose.msra.mxu0 0.0
    %406 = vmatprep.subr.mxu0 0.0
    %407 = vmatpush1.xpose.msra.mxu0 0.0
    %408 = vmatprep.subr.mxu0 0.0
    %409 = vmatpush1.xpose.msra.mxu0 0.0
    %410 = vmatprep.subr.mxu0 0.0
    %411 = vmatpush1.xpose.msra.mxu0 0.0
    %412 = vmatprep.subr.mxu0 0.0
    %413 = vmatpush1.xpose.msra.mxu0 0.0
    %414 = vmatprep.subr.mxu0 0.0
    %415 = vmatpush1.xpose.msra.mxu0 0.0
    %416 = vmatprep.subr.mxu0 0.0
    %417 = vmatpush1.xpose.msra.mxu0 0.0
    %418 = vmatprep.subr.mxu0 0.0
    %419 = vmatpush1.xpose.msra.mxu0 0.0
    %420 = vmatprep.subr.mxu0 0.0
    %421 = vmatpush1.xpose.msra.mxu0 0.0
    %422 = vmatprep.subr.mxu0 0.0
    %423 = vmatpush1.xpose.msra.mxu0 0.0
    %424 = vmatprep.subr.mxu0 0.0
    %425 = vmatpush1.xpose.msra.mxu0 0.0
    %426 = vmatprep.subr.mxu0 0.0
    %427 = vmatpush1.xpose.msra.mxu0 0.0
    %428 = vmatprep.subr.mxu0 0.0
    %429 = vmatpush1.xpose.msra.mxu0 0.0
    %430 = vmatprep.subr.mxu0 0.0
    %431 = vmatpush1.xpose.msra.mxu0 0.0
    %432 = vmatprep.subr.mxu0 0.0
    %433 = vmatpush1.xpose.msra.mxu0 0.0
    %434 = vmatprep.subr.mxu0 0.0
    %435 = vmatpush1.xpose.msra.mxu0 0.0
    %436 = vmatprep.mubr.f32.mxu0 0.0
    %437 = vmatmul.mubr.f32.gmra.mrb[0].mxu0 %v367
    %v438 = vpop.f32.mrb[0].mxu0
    %v439 = vadd.f32 0.0, %v438
    %v440 = vpop.f32.mrb[0].mxu0
    %441 = vdwg.mxu0
    %vm442 = vcmask 64512
    %v443 = vsel %vm442, %v363, -inf
    %444 = vmax.xlane.f32.xlu0 %v443
    %v445 = vpop.xlane.xlu0 %444
    %v446 = vsel %vm442, %v439, -inf
    %447 = vmax.xlane.f32.xlu0 %v446
    %v448 = vpop.xlane.xlu0 %447
    %v449 = vsub.f32 %v363, %v445
    %v450 = vsub.f32 %v439, %v448
    %v451 = vmul.f32 %v449, 1.442695
    %v452 = vpow.pop %v451
    %v453 = vmul.f32 %v450, 1.442695
    %v454 = vpow.pop %v453
    %v455 = vsel %vm442, %v452, 0.0
    %456 = vadd.xlane.f32.xlu0 %v455
    %v457 = vpop.xlane.xlu0 %456
    %v458 = vsel %vm442, %v454, 0.0
    %459 = vadd.xlane.f32.xlu0 %v458
    %v460 = vpop.xlane.xlu0 %459
    %v461 = vrcp.pop %v457
    %v462 = vrcp.pop %v460
    %v463 = vmul.f32 %v452, %v461
    %v464 = vmul.f32 %v454, %v462
    %465 = vrot.lane.b32.xlu0 %v282, 96
    %v466 = vpop.permute.xlu0 %465
    %v469 = vsel %vm442, %v463, 0
    %471 = vmatprep.subr.mxu0 0.0
    %472 = vmatpush1.msra.mxu0 %v466
    %473 = vmatprep.subr.mxu0 0.0
    %474 = vmatpush1.msra.mxu0 0.0
    %475 = vmatprep.subr.mxu0 0.0
    %476 = vmatpush1.msra.mxu0 0.0
    %477 = vmatprep.subr.mxu0 0.0
    %478 = vmatpush1.msra.mxu0 0.0
    %479 = vmatprep.subr.mxu0 0.0
    %480 = vmatpush1.msra.mxu0 0.0
    %481 = vmatprep.subr.mxu0 0.0
    %482 = vmatpush1.msra.mxu0 0.0
    %483 = vmatprep.subr.mxu0 0.0
    %484 = vmatpush1.msra.mxu0 0.0
    %485 = vmatprep.subr.mxu0 0.0
    %486 = vmatpush1.msra.mxu0 0.0
    %487 = vmatprep.subr.mxu0 0.0
    %488 = vmatpush1.msra.mxu0 0.0
    %489 = vmatprep.subr.mxu0 0.0
    %490 = vmatpush1.msra.mxu0 0.0
    %491 = vmatprep.subr.mxu0 0.0
    %492 = vmatpush1.msra.mxu0 0.0
    %493 = vmatprep.subr.mxu0 0.0
    %494 = vmatpush1.msra.mxu0 0.0
    %495 = vmatprep.subr.mxu0 0.0
    %496 = vmatpush1.msra.mxu0 0.0
    %497 = vmatprep.subr.mxu0 0.0
    %498 = vmatpush1.msra.mxu0 0.0
    %499 = vmatprep.subr.mxu0 0.0
    %500 = vmatpush1.msra.mxu0 0.0
    %501 = vmatprep.subr.mxu0 0.0
    %502 = vmatpush1.msra.mxu0 0.0
    %503 = vmatprep.subr.mxu0 0.0
    %504 = vmatpush1.msra.mxu0 0.0
    %505 = vmatprep.subr.mxu0 0.0
    %506 = vmatpush1.msra.mxu0 0.0
    %507 = vmatprep.subr.mxu0 0.0
    %508 = vmatpush1.msra.mxu0 0.0
    %509 = vmatprep.subr.mxu0 0.0
    %510 = vmatpush1.msra.mxu0 0.0
    %511 = vmatprep.subr.mxu0 0.0
    %512 = vmatpush1.msra.mxu0 0.0
    %513 = vmatprep.subr.mxu0 0.0
    %514 = vmatpush1.msra.mxu0 0.0
    %515 = vmatprep.subr.mxu0 0.0
    %516 = vmatpush1.msra.mxu0 0.0
    %517 = vmatprep.subr.mxu0 0.0
    %518 = vmatpush1.msra.mxu0 0.0
    %519 = vmatprep.subr.mxu0 0.0
    %520 = vmatpush1.msra.mxu0 0.0
    %521 = vmatprep.subr.mxu0 0.0
    %522 = vmatpush1.msra.mxu0 0.0
    %523 = vmatprep.subr.mxu0 0.0
    %524 = vmatpush1.msra.mxu0 0.0
    %525 = vmatprep.subr.mxu0 0.0
    %526 = vmatpush1.msra.mxu0 0.0
    %527 = vmatprep.subr.mxu0 0.0
    %528 = vmatpush1.msra.mxu0 0.0
    %529 = vmatprep.subr.mxu0 0.0
    %530 = vmatpush1.msra.mxu0 0.0
    %531 = vmatprep.subr.mxu0 0.0
    %532 = vmatpush1.msra.mxu0 0.0
    %533 = vmatprep.subr.mxu0 0.0
    %534 = vmatpush1.msra.mxu0 0.0
    %535 = vmatprep.mubr.f32.mxu0 0.0
    %536 = vmatmul.mubr.f32.gmra.mrb[0].mxu0 %v469
    %v537 = vpop.f32.mrb[0].mxu0
    %v538 = vadd.f32 0.0, %v537
    %v539 = vpop.f32.mrb[0].mxu0
    %540 = vdwg.mxu0
    %541 = vrot.lane.b32.xlu0 %v287, 96
    %v542 = vpop.permute.xlu0 %541
    %v545 = vsel %vm442, %v464, 0
    %547 = vmatprep.subr.mxu0 0.0
    %548 = vmatpush1.msra.mxu0 %v542
    %549 = vmatprep.subr.mxu0 0.0
    %550 = vmatpush1.msra.mxu0 0.0
    %551 = vmatprep.subr.mxu0 0.0
    %552 = vmatpush1.msra.mxu0 0.0
    %553 = vmatprep.subr.mxu0 0.0
    %554 = vmatpush1.msra.mxu0 0.0
    %555 = vmatprep.subr.mxu0 0.0
    %556 = vmatpush1.msra.mxu0 0.0
    %557 = vmatprep.subr.mxu0 0.0
    %558 = vmatpush1.msra.mxu0 0.0
    %559 = vmatprep.subr.mxu0 0.0
    %560 = vmatpush1.msra.mxu0 0.0
    %561 = vmatprep.subr.mxu0 0.0
    %562 = vmatpush1.msra.mxu0 0.0
    %563 = vmatprep.subr.mxu0 0.0
    %564 = vmatpush1.msra.mxu0 0.0
    %565 = vmatprep.subr.mxu0 0.0
    %566 = vmatpush1.msra.mxu0 0.0
    %567 = vmatprep.subr.mxu0 0.0
    %568 = vmatpush1.msra.mxu0 0.0
    %569 = vmatprep.subr.mxu0 0.0
    %570 = vmatpush1.msra.mxu0 0.0
    %571 = vmatprep.subr.mxu0 0.0
    %572 = vmatpush1.msra.mxu0 0.0
    %573 = vmatprep.subr.mxu0 0.0
    %574 = vmatpush1.msra.mxu0 0.0
    %575 = vmatprep.subr.mxu0 0.0
    %576 = vmatpush1.msra.mxu0 0.0
    %577 = vmatprep.subr.mxu0 0.0
    %578 = vmatpush1.msra.mxu0 0.0
    %579 = vmatprep.subr.mxu0 0.0
    %580 = vmatpush1.msra.mxu0 0.0
    %581 = vmatprep.subr.mxu0 0.0
    %582 = vmatpush1.msra.mxu0 0.0
    %583 = vmatprep.subr.mxu0 0.0
    %584 = vmatpush1.msra.mxu0 0.0
    %585 = vmatprep.subr.mxu0 0.0
    %586 = vmatpush1.msra.mxu0 0.0
    %587 = vmatprep.subr.mxu0 0.0
    %588 = vmatpush1.msra.mxu0 0.0
    %589 = vmatprep.subr.mxu0 0.0
    %590 = vmatpush1.msra.mxu0 0.0
    %591 = vmatprep.subr.mxu0 0.0
    %592 = vmatpush1.msra.mxu0 0.0
    %593 = vmatprep.subr.mxu0 0.0
    %594 = vmatpush1.msra.mxu0 0.0
    %595 = vmatprep.subr.mxu0 0.0
    %596 = vmatpush1.msra.mxu0 0.0
    %597 = vmatprep.subr.mxu0 0.0
    %598 = vmatpush1.msra.mxu0 0.0
    %599 = vmatprep.subr.mxu0 0.0
    %600 = vmatpush1.msra.mxu0 0.0
    %601 = vmatprep.subr.mxu0 0.0
    %602 = vmatpush1.msra.mxu0 0.0
    %603 = vmatprep.subr.mxu0 0.0
    %604 = vmatpush1.msra.mxu0 0.0
    %605 = vmatprep.subr.mxu0 0.0
    %606 = vmatpush1.msra.mxu0 0.0
    %607 = vmatprep.subr.mxu0 0.0
    %608 = vmatpush1.msra.mxu0 0.0
    %609 = vmatprep.subr.mxu0 0.0
    %610 = vmatpush1.msra.mxu0 0.0
    %611 = vmatprep.mubr.f32.mxu0 0.0
    %612 = vmatmul.mubr.f32.gmra.mrb[0].mxu0 %v545
    %v613 = vpop.f32.mrb[0].mxu0
    %v614 = vadd.f32 0.0, %v613
    %v615 = vpop.f32.mrb[0].mxu0
    %616 = vdwg.mxu0
    %v617 = vld [vmem:[#allocation10] sm:$0xff]
    %v618 = vld [vmem:[#allocation10 + $0x8] sm:$0xff]
    %v619 = vld [vmem:[#allocation10 + $0x10] sm:$0xff]
    %v620 = vld [vmem:[#allocation10 + $0x18] sm:$0xff]
    %v621 = vld [vmem:[%s7] sm:$0x1]
    %v623 = vlaneseq
    %v624 = vshrl.u32 %v623, 7
    %v625 = vsub.s32 0, %v624
    %v626 = vrot.slane %v621, %v625
    %v629 = vsel %vm116, %v538, 0
    %v632 = vsel %vm116, %v614, 0
    %634 = vmatprep.subr.mxu0 0.0
    %635 = vmatpush1.msra.mxu0 %v617
    %636 = vmatprep.subr.mxu0 0.0
    %637 = vmatpush1.msra.mxu0 %v618
    %638 = vmatprep.subr.mxu0 0.0
    %639 = vmatpush1.msra.mxu0 %v619
    %640 = vmatprep.subr.mxu0 0.0
    %641 = vmatpush1.msra.mxu0 %v620
    %642 = vmatprep.subr.mxu0 0.0
    %643 = vmatpush1.msra.mxu0 0.0
    %644 = vmatprep.subr.mxu0 0.0
    %645 = vmatpush1.msra.mxu0 0.0
    %646 = vmatprep.subr.mxu0 0.0
    %647 = vmatpush1.msra.mxu0 0.0
    %648 = vmatprep.subr.mxu0 0.0
    %649 = vmatpush1.msra.mxu0 0.0
    %650 = vmatprep.subr.mxu0 0.0
    %651 = vmatpush1.msra.mxu0 0.0
    %652 = vmatprep.subr.mxu0 0.0
    %653 = vmatpush1.msra.mxu0 0.0
    %654 = vmatprep.subr.mxu0 0.0
    %655 = vmatpush1.msra.mxu0 0.0
    %656 = vmatprep.subr.mxu0 0.0
    %657 = vmatpush1.msra.mxu0 0.0
    %658 = vmatprep.subr.mxu0 0.0
    %659 = vmatpush1.msra.mxu0 0.0
    %660 = vmatprep.subr.mxu0 0.0
    %661 = vmatpush1.msra.mxu0 0.0
    %662 = vmatprep.subr.mxu0 0.0
    %663 = vmatpush1.msra.mxu0 0.0
    %664 = vmatprep.subr.mxu0 0.0
    %665 = vmatpush1.msra.mxu0 0.0
    %666 = vmatprep.subr.mxu0 0.0
    %667 = vmatpush1.msra.mxu0 0.0
    %668 = vmatprep.subr.mxu0 0.0
    %669 = vmatpush1.msra.mxu0 0.0
    %670 = vmatprep.subr.mxu0 0.0
    %671 = vmatpush1.msra.mxu0 0.0
    %672 = vmatprep.subr.mxu0 0.0
    %673 = vmatpush1.msra.mxu0 0.0
    %674 = vmatprep.subr.mxu0 0.0
    %675 = vmatpush1.msra.mxu0 0.0
    %676 = vmatprep.subr.mxu0 0.0
    %677 = vmatpush1.msra.mxu0 0.0
    %678 = vmatprep.subr.mxu0 0.0
    %679 = vmatpush1.msra.mxu0 0.0
    %680 = vmatprep.subr.mxu0 0.0
    %681 = vmatpush1.msra.mxu0 0.0
    %682 = vmatprep.subr.mxu0 0.0
    %683 = vmatpush1.msra.mxu0 0.0
    %684 = vmatprep.subr.mxu0 0.0
    %685 = vmatpush1.msra.mxu0 0.0
    %686 = vmatprep.subr.mxu0 0.0
    %687 = vmatpush1.msra.mxu0 0.0
    %688 = vmatprep.subr.mxu0 0.0
    %689 = vmatpush1.msra.mxu0 0.0
    %690 = vmatprep.subr.mxu0 0.0
    %691 = vmatpush1.msra.mxu0 0.0
    %692 = vmatprep.subr.mxu0 0.0
    %693 = vmatpush1.msra.mxu0 0.0
    %694 = vmatprep.subr.mxu0 0.0
    %695 = vmatpush1.msra.mxu0 0.0
    %696 = vmatprep.subr.mxu0 0.0
    %697 = vmatpush1.msra.mxu0 0.0
    %698 = vmatprep.mubr.f32.mxu0 0.0
    %699 = vmatmul.mubr.f32.gmra.mrb[0].mxu0 %v629
    %v700 = vpop.f32.mrb[0].mxu0
    %v701 = vadd.f32 %v626, %v700
    %v702 = vpop.f32.mrb[0].mxu0
    %703 = vmatprep.mubr.f32.mxu0 0.0
    %704 = vmatmul.mubr.f32.gmra.mrb[0].mxu0 %v632
    %v705 = vpop.f32.mrb[0].mxu0
    %v706 = vadd.f32 %v626, %v705
    %v707 = vpop.f32.mrb[0].mxu0
    %708 = vdwg.mxu0
    %v709 = vtanh.pop %v701
    %v710 = vtanh.pop %v706
    %711 = vst.msk [vmem:[#allocation11] sm:$0xff] %vm116, %v709
    %712 = vst.msk [vmem:[#allocation11 + $0x8] sm:$0xff] %vm116, %v710
    %713 = vst.msk [vmem:[#allocation12] sm:$0xff] %vm442, %v463
    %714 = vst.msk [vmem:[#allocation12 + $0x8] sm:$0xff] %vm442, %v464
    // Predicated region
    $region54: #{tpu_custom_call.1} parent=1 // pred_check
      _
    $region55: #{tpu_custom_call.1} parent=1 // pred_check_branch
      %716 = sbr.rel (0) target = $region57
    $region56: #{tpu_custom_call.1} parent=1 // pred_region
      %s718 = ssub.s32 256, 256
      %719 = vsyncadd [#allocation4], %s718
      %s720 = sshll.u32 [#allocation11], 4
      %s721 = int_to_ptr.vmem [resolvable:$true] %s720
      %726 = dma.vmem_to_hbm [thread:$0]  %s721, 256, %s8, [#allocation4], 128, 128, 8
    $region57: #{tpu_custom_call.1} parent=1 // pred_fallthru
      _
    // Predicated region
    $region58: #{tpu_custom_call.1} parent=1 // pred_check
      _
    $region59: #{tpu_custom_call.1} parent=1 // pred_check_branch
      %728 = sbr.rel (0) target = $region61
    $region60: #{tpu_custom_call.1} parent=1 // pred_region
      %s730 = ssub.s32 256, 256
      %731 = vsyncadd [#allocation13], %s730
      %s732 = sshll.u32 [#allocation12], 4
      %s733 = int_to_ptr.vmem [resolvable:$true] %s732
      %738 = dma.vmem_to_hbm [thread:$0]  %s733, 256, %s9, [#allocation13], 128, 128, 8
    $region61: #{tpu_custom_call.1} parent=1 // pred_fallthru
      _
    // Predicated region
    $region62: #{tpu_custom_call.1} parent=1 // pred_check
      _
    $region63: #{tpu_custom_call.1} parent=1 // pred_check_branch
      %740 = sbr.rel (0) target = $region65
    $region64: #{tpu_custom_call.1} parent=1 // pred_region
      %741 = dma.done [#allocation4], 256
    $region65: #{tpu_custom_call.1} parent=1 // pred_fallthru
      _
    // Predicated region
    $region66: #{tpu_custom_call.1} parent=1 // pred_check
      _
    $region67: #{tpu_custom_call.1} parent=1 // pred_check_branch
      %743 = sbr.rel (0) target = $region69
    $region68: #{tpu_custom_call.1} parent=1 // pred_region
      %744 = dma.done [#allocation13], 256
    $region69: #{tpu_custom_call.1} parent=1 // pred_fallthru
      _
    %745 = vsyncpa [#allocation3], 1
    %746 = vsyncpa [#allocation6], 1
    %747 = vsyncpa [#allocation9], 1
    %748 = vsyncpa [#allocation4], 1
    %749 = vsyncpa [#allocation13], 1

// kernel: tpu_custom_call.1
$region0: #{tpu_custom_call.1}
  #allocation0 [shape = 'u32[]', space=smem, size = 0x4, offset = 0x4, fixed_abs, tag = 'smem constant byte address 0x4 - core index']
  #allocation1 [shape = 'u32[144,128]{1,0:T(1,128)}', space=vmem, size = 0x12000, scoped, tag = 'internal scratch']
  %s0 = inlined_call_operand.hbm [shape: f32[2,8,32], index: 0, kind: input, shape index: {}]
  %s1 = inlined_call_operand.hbm [shape: f32[2,8,32], index: 1, kind: input, shape index: {}]
  %s2 = inlined_call_operand.hbm [shape: f32[32,32], index: 2, kind: input, shape index: {}]
  %s3 = inlined_call_operand.vmem [shape: f32[1,32], index: 3, kind: input, shape index: {}]
  %s4 = inlined_call_operand.hbm [shape: f32[32,64], index: 4, kind: input, shape index: {}]
  %s5 = inlined_call_operand.vmem [shape: f32[1,64], index: 5, kind: input, shape index: {}]
  %s6 = inlined_call_operand.hbm [shape: f32[32,32], index: 6, kind: input, shape index: {}]
  %s7 = inlined_call_operand.vmem [shape: f32[1,32], index: 7, kind: input, shape index: {}]
  %s8 = inlined_call_operand.hbm [shape: f32[2,8,32], index: 8, kind: output, shape index: {0}]
  %s9 = inlined_call_operand.hbm [shape: f32[2,8,8], index: 9, kind: output, shape index: {1}]
  %10 = xla_tuple %s8, %s9
  %s11 = sld [smem:[#allocation0]]
  $region70: #{tpu_custom_call.1} parent=0
    _
  %s13 = ssub.s32 1, %s11
  %s14 = scalar_select 0, %s13, %s11
  $region1: #{tpu_custom_call.1} parent=0
    #allocation2 [shape = 'u8[8192]{0}', space=vmem, size = 0x2000, scoped, tag = 'input window, operand 0, single buffered']
    #allocation3 [shape = 's32[1]{0}', space=sflag, size = 0x4, scoped, tag = 'scoped memory for tpu_custom_call.1']
    #allocation4 [shape = 's32[1]{0}', space=sflag, size = 0x4, scoped, tag = 'scoped memory for tpu_custom_call.1']
    #allocation5 [shape = 'u8[8192]{0}', space=vmem, size = 0x2000, scoped, tag = 'input window, operand 1, single buffered']
    #allocation6 [shape = 's32[1]{0}', space=sflag, size = 0x4, scoped, tag = 'scoped memory for tpu_custom_call.1']
    #allocation7 [shape = 'u8[16384]{0}', space=vmem, size = 0x4000, scoped, tag = 'input window, operand 2, single buffered']
    #allocation8 [shape = 'u8[16384]{0}', space=vmem, size = 0x4000, scoped, tag = 'input window, operand 4, single buffered']
    #allocation9 [shape = 's32[1]{0}', space=sflag, size = 0x4, scoped, tag = 'scoped memory for tpu_custom_call.1']
    #allocation10 [shape = 'u8[16384]{0}', space=vmem, size = 0x4000, scoped, tag = 'input window, operand 6, single buffered']
    #allocation11 [shape = 'u8[8192]{0}', space=vmem, size = 0x2000, scoped, tag = 'output window, operand 0, single buffered']
    #allocation12 [shape = 'u8[8192]{0}', space=vmem, size = 0x2000, scoped, tag = 'output window, operand 1, single buffered']
    #allocation13 [shape = 's32[1]{0}', space=sflag, size = 0x4, scoped, tag = 'scoped memory for tpu_custom_call.1']
    %15 = vsyncpa [#allocation3], 0
    %16 = vsyncpa [#allocation6], 0
    %17 = vsyncpa [#allocation9], 0
    %18 = vsyncpa [#allocation4], 0
    %19 = vsyncpa [#allocation13], 0
    // Predicated region
    $region2: #{tpu_custom_call.1} parent=1 // pred_check
      _
    $region3: #{tpu_custom_call.1} parent=1 // pred_check_branch
      %21 = sbr.rel (0) target = $region5
    $region4: #{tpu_custom_call.1} parent=1 // pred_region
      %s23 = ssub.s32 256, 256
      %24 = vsyncadd [#allocation3], %s23
      %s25 = sshll.u32 [#allocation2], 4
      %s26 = int_to_ptr.vmem [resolvable:$true] %s25
      %31 = dma.hbm_to_vmem [thread:$0]  %s0, 256, %s26, [#allocation3], 128, 128, 8
    $region5: #{tpu_custom_call.1} parent=1 // pred_fallthru
      _
    // Predicated region
    $region6: #{tpu_custom_call.1} parent=1 // pred_check
      _
    $region7: #{tpu_custom_call.1} parent=1 // pred_check_branch
      %33 = sbr.rel (0) target = $region9
    $region8: #{tpu_custom_call.1} parent=1 // pred_region
      %s35 = ssub.s32 256, 256
      %36 = vsyncadd [#allocation6], %s35
      %s37 = sshll.u32 [#allocation5], 4
      %s38 = int_to_ptr.vmem [resolvable:$true] %s37
      %43 = dma.hbm_to_vmem [thread:$0]  %s1, 256, %s38, [#allocation6], 128, 128, 8
    $region9: #{tpu_custom_call.1} parent=1 // pred_fallthru
      _
    // Predicated region
    $region10: #{tpu_custom_call.1} parent=1 // pred_check
      _
    $region11: #{tpu_custom_call.1} parent=1 // pred_check_branch
      %45 = sbr.rel (0) target = $region13
    $region12: #{tpu_custom_call.1} parent=1 // pred_region
      %s47 = ssub.s32 512, 512
      %48 = vsyncadd [#allocation6], %s47
      %s49 = sshll.u32 [#allocation7], 4
      %s50 = int_to_ptr.vmem [resolvable:$true] %s49
      %55 = dma.hbm_to_vmem [thread:$0]  %s2, 512, %s50, [#allocation6], 128, 128, 8
    $region13: #{tpu_custom_call.1} parent=1 // pred_fallthru
      _
    // Predicated region
    $region14: #{tpu_custom_call.1} parent=1 // pred_check
      _
    $region15: #{tpu_custom_call.1} parent=1 // pred_check_branch
      %57 = sbr.rel (0) target = $region17
    $region16: #{tpu_custom_call.1} parent=1 // pred_region
      _
    $region17: #{tpu_custom_call.1} parent=1 // pred_fallthru
      _
    // Predicated region
    $region18: #{tpu_custom_call.1} parent=1 // pred_check
      _
    $region19: #{tpu_custom_call.1} parent=1 // pred_check_branch
      %59 = sbr.rel (0) target = $region21
    $region20: #{tpu_custom_call.1} parent=1 // pred_region
      %s61 = ssub.s32 512, 512
      %62 = vsyncadd [#allocation9], %s61
      %s63 = sshll.u32 [#allocation8], 4
      %s64 = int_to_ptr.vmem [resolvable:$true] %s63
      %69 = dma.hbm_to_vmem [thread:$0]  %s4, 512, %s64, [#allocation9], 128, 128, 8
    $region21: #{tpu_custom_call.1} parent=1 // pred_fallthru
      _
    // Predicated region
    $region22: #{tpu_custom_call.1} parent=1 // pred_check
      _
    $region23: #{tpu_custom_call.1} parent=1 // pred_check_branch
      %71 = sbr.rel (0) target = $region25
    $region24: #{tpu_custom_call.1} parent=1 // pred_region
      _
    $region25: #{tpu_custom_call.1} parent=1 // pred_fallthru
      _
    // Predicated region
    $region26: #{tpu_custom_call.1} parent=1 // pred_check
      _
    $region27: #{tpu_custom_call.1} parent=1 // pred_check_branch
      %73 = sbr.rel (0) target = $region29
    $region28: #{tpu_custom_call.1} parent=1 // pred_region
      %s75 = ssub.s32 512, 512
      %76 = vsyncadd [#allocation9], %s75
      %s77 = sshll.u32 [#allocation10], 4
      %s78 = int_to_ptr.vmem [resolvable:$true] %s77
      %83 = dma.hbm_to_vmem [thread:$0]  %s6, 512, %s78, [#allocation9], 128, 128, 8
    $region29: #{tpu_custom_call.1} parent=1 // pred_fallthru
      _
    // Predicated region
    $region30: #{tpu_custom_call.1} parent=1 // pred_check
      _
    $region31: #{tpu_custom_call.1} parent=1 // pred_check_branch
      %85 = sbr.rel (0) target = $region33
    $region32: #{tpu_custom_call.1} parent=1 // pred_region
      _
    $region33: #{tpu_custom_call.1} parent=1 // pred_fallthru
      _
    // Predicated region
    $region34: #{tpu_custom_call.1} parent=1 // pred_check
      _
    $region35: #{tpu_custom_call.1} parent=1 // pred_check_branch
      %87 = sbr.rel (0) target = $region37
    $region36: #{tpu_custom_call.1} parent=1 // pred_region
      %88 = dma.done [#allocation3], 256
    $region37: #{tpu_custom_call.1} parent=1 // pred_fallthru
      _
    // Predicated region
    $region38: #{tpu_custom_call.1} parent=1 // pred_check
      _
    $region39: #{tpu_custom_call.1} parent=1 // pred_check_branch
      %90 = sbr.rel (0) target = $region41
    $region40: #{tpu_custom_call.1} parent=1 // pred_region
      %91 = dma.done [#allocation6], 256
    $region41: #{tpu_custom_call.1} parent=1 // pred_fallthru
      _
    // Predicated region
    $region42: #{tpu_custom_call.1} parent=1 // pred_check
      _
    $region43: #{tpu_custom_call.1} parent=1 // pred_check_branch
      %93 = sbr.rel (0) target = $region45
    $region44: #{tpu_custom_call.1} parent=1 // pred_region
      %94 = dma.done [#allocation6], 512
    $region45: #{tpu_custom_call.1} parent=1 // pred_fallthru
      _
    // Predicated region
    $region46: #{tpu_custom_call.1} parent=1 // pred_check
      _
    $region47: #{tpu_custom_call.1} parent=1 // pred_check_branch
      %96 = sbr.rel (0) target = $region49
    $region48: #{tpu_custom_call.1} parent=1 // pred_region
      %97 = dma.done [#allocation9], 512
    $region49: #{tpu_custom_call.1} parent=1 // pred_fallthru
      _
    // Predicated region
    $region50: #{tpu_custom_call.1} parent=1 // pred_check
      _
    $region51: #{tpu_custom_call.1} parent=1 // pred_check_branch
      %99 = sbr.rel (0) target = $region53
    $region52: #{tpu_custom_call.1} parent=1 // pred_region
      %100 = dma.done [#allocation9], 512
    $region53: #{tpu_custom_call.1} parent=1 // pred_fallthru
      _
    %v101 = vld [vmem:[#allocation2] sm:$0xff]
    %v102 = vld [vmem:[#allocation2 + $0x8] sm:$0xff]
    %v103 = vld [vmem:[#allocation5] sm:$0xff]
    %v104 = vld [vmem:[#allocation5 + $0x8] sm:$0xff]
    %v105 = vld [vmem:[#allocation7] sm:$0xff]
    %v106 = vld [vmem:[#allocation7 + $0x8] sm:$0xff]
    %v107 = vld [vmem:[#allocation7 + $0x10] sm:$0xff]
    %v108 = vld [vmem:[#allocation7 + $0x18] sm:$0xff]
    %v109 = vld [vmem:[%s3] sm:$0x1]
    %v111 = vlaneseq
    %v112 = vshrl.u32 %v111, 7
    %v113 = vsub.s32 0, %v112
    %v114 = vrot.slane %v109, %v113
    %vm116 = vcmask 261120
    %v118 = vsel %vm116, %v101, 0
    %v121 = vsel %vm116, %v102, 0
    %123 = vmatprep.subr.mxu0 0.0
    %124 = vmatpush1.msra.mxu0 %v105
    %125 = vmatprep.subr.mxu0 0.0
    %126 = vmatpush1.msra.mxu0 %v106
    %127 = vmatprep.subr.mxu0 0.0
    %128 = vmatpush1.msra.mxu0 %v107
    %129 = vmatprep.subr.mxu0 0.0
    %130 = vmatpush1.msra.mxu0 %v108
    %131 = vmatprep.subr.mxu0 0.0
    %132 = vmatpush1.msra.mxu0 0.0
    %133 = vmatprep.subr.mxu0 0.0
    %134 = vmatpush1.msra.mxu0 0.0
    %135 = vmatprep.subr.mxu0 0.0
    %136 = vmatpush1.msra.mxu0 0.0
    %137 = vmatprep.subr.mxu0 0.0
    %138 = vmatpush1.msra.mxu0 0.0
    %139 = vmatprep.subr.mxu0 0.0
    %140 = vmatpush1.msra.mxu0 0.0
    %141 = vmatprep.subr.mxu0 0.0
    %142 = vmatpush1.msra.mxu0 0.0
    %143 = vmatprep.subr.mxu0 0.0
    %144 = vmatpush1.msra.mxu0 0.0
    %145 = vmatprep.subr.mxu0 0.0
    %146 = vmatpush1.msra.mxu0 0.0
    %147 = vmatprep.subr.mxu0 0.0
    %148 = vmatpush1.msra.mxu0 0.0
    %149 = vmatprep.subr.mxu0 0.0
    %150 = vmatpush1.msra.mxu0 0.0
    %151 = vmatprep.subr.mxu0 0.0
    %152 = vmatpush1.msra.mxu0 0.0
    %153 = vmatprep.subr.mxu0 0.0
    %154 = vmatpush1.msra.mxu0 0.0
    %155 = vmatprep.subr.mxu0 0.0
    %156 = vmatpush1.msra.mxu0 0.0
    %157 = vmatprep.subr.mxu0 0.0
    %158 = vmatpush1.msra.mxu0 0.0
    %159 = vmatprep.subr.mxu0 0.0
    %160 = vmatpush1.msra.mxu0 0.0
    %161 = vmatprep.subr.mxu0 0.0
    %162 = vmatpush1.msra.mxu0 0.0
    %163 = vmatprep.subr.mxu0 0.0
    %164 = vmatpush1.msra.mxu0 0.0
    %165 = vmatprep.subr.mxu0 0.0
    %166 = vmatpush1.msra.mxu0 0.0
    %167 = vmatprep.subr.mxu0 0.0
    %168 = vmatpush1.msra.mxu0 0.0
    %169 = vmatprep.subr.mxu0 0.0
    %170 = vmatpush1.msra.mxu0 0.0
    %171 = vmatprep.subr.mxu0 0.0
    %172 = vmatpush1.msra.mxu0 0.0
    %173 = vmatprep.subr.mxu0 0.0
    %174 = vmatpush1.msra.mxu0 0.0
    %175 = vmatprep.subr.mxu0 0.0
    %176 = vmatpush1.msra.mxu0 0.0
    %177 = vmatprep.subr.mxu0 0.0
    %178 = vmatpush1.msra.mxu0 0.0
    %179 = vmatprep.subr.mxu0 0.0
    %180 = vmatpush1.msra.mxu0 0.0
    %181 = vmatprep.subr.mxu0 0.0
    %182 = vmatpush1.msra.mxu0 0.0
    %183 = vmatprep.subr.mxu0 0.0
    %184 = vmatpush1.msra.mxu0 0.0
    %185 = vmatprep.subr.mxu0 0.0
    %186 = vmatpush1.msra.mxu0 0.0
    %187 = vmatprep.mubr.f32.mxu0 0.0
    %188 = vmatmul.mubr.f32.gmra.mrb[0].mxu0 %v118
    %v189 = vpop.f32.mrb[0].mxu0
    %v190 = vadd.f32 %v114, %v189
    %v191 = vpop.f32.mrb[0].mxu0
    %192 = vmatprep.mubr.f32.mxu0 0.0
    %193 = vmatmul.mubr.f32.gmra.mrb[0].mxu0 %v121
    %v194 = vpop.f32.mrb[0].mxu0
    %v195 = vadd.f32 %v114, %v194
    %v196 = vpop.f32.mrb[0].mxu0
    %197 = vdwg.mxu0
    %v198 = vld [vmem:[#allocation8] sm:$0xff]
    %v199 = vld [vmem:[#allocation8 + $0x8] sm:$0xff]
    %v200 = vld [vmem:[#allocation8 + $0x10] sm:$0xff]
    %v201 = vld [vmem:[#allocation8 + $0x18] sm:$0xff]
    %v202 = vld [vmem:[%s5] sm:$0x1]
    %v204 = vlaneseq
    %v205 = vshrl.u32 %v204, 7
    %v206 = vsub.s32 0, %v205
    %v207 = vrot.slane %v202, %v206
    %v210 = vsel %vm116, %v103, 0
    %v213 = vsel %vm116, %v104, 0
    %215 = vmatprep.subr.mxu0 0.0
    %216 = vmatpush1.msra.mxu0 %v198
    %217 = vmatprep.subr.mxu0 0.0
    %218 = vmatpush1.msra.mxu0 %v199
    %219 = vmatprep.subr.mxu0 0.0
    %220 = vmatpush1.msra.mxu0 %v200
    %221 = vmatprep.subr.mxu0 0.0
    %222 = vmatpush1.msra.mxu0 %v201
    %223 = vmatprep.subr.mxu0 0.0
    %224 = vmatpush1.msra.mxu0 0.0
    %225 = vmatprep.subr.mxu0 0.0
    %226 = vmatpush1.msra.mxu0 0.0
    %227 = vmatprep.subr.mxu0 0.0
    %228 = vmatpush1.msra.mxu0 0.0
    %229 = vmatprep.subr.mxu0 0.0
    %230 = vmatpush1.msra.mxu0 0.0
    %231 = vmatprep.subr.mxu0 0.0
    %232 = vmatpush1.msra.mxu0 0.0
    %233 = vmatprep.subr.mxu0 0.0
    %234 = vmatpush1.msra.mxu0 0.0
    %235 = vmatprep.subr.mxu0 0.0
    %236 = vmatpush1.msra.mxu0 0.0
    %237 = vmatprep.subr.mxu0 0.0
    %238 = vmatpush1.msra.mxu0 0.0
    %239 = vmatprep.subr.mxu0 0.0
    %240 = vmatpush1.msra.mxu0 0.0
    %241 = vmatprep.subr.mxu0 0.0
    %242 = vmatpush1.msra.mxu0 0.0
    %243 = vmatprep.subr.mxu0 0.0
    %244 = vmatpush1.msra.mxu0 0.0
    %245 = vmatprep.subr.mxu0 0.0
    %246 = vmatpush1.msra.mxu0 0.0
    %247 = vmatprep.subr.mxu0 0.0
    %248 = vmatpush1.msra.mxu0 0.0
    %249 = vmatprep.subr.mxu0 0.0
    %250 = vmatpush1.msra.mxu0 0.0
    %251 = vmatprep.subr.mxu0 0.0
    %252 = vmatpush1.msra.mxu0 0.0
    %253 = vmatprep.subr.mxu0 0.0
    %254 = vmatpush1.msra.mxu0 0.0
    %255 = vmatprep.subr.mxu0 0.0
    %256 = vmatpush1.msra.mxu0 0.0
    %257 = vmatprep.subr.mxu0 0.0
    %258 = vmatpush1.msra.mxu0 0.0
    %259 = vmatprep.subr.mxu0 0.0
    %260 = vmatpush1.msra.mxu0 0.0
    %261 = vmatprep.subr.mxu0 0.0
    %262 = vmatpush1.msra.mxu0 0.0
    %263 = vmatprep.subr.mxu0 0.0
    %264 = vmatpush1.msra.mxu0 0.0
    %265 = vmatprep.subr.mxu0 0.0
    %266 = vmatpush1.msra.mxu0 0.0
    %267 = vmatprep.subr.mxu0 0.0
    %268 = vmatpush1.msra.mxu0 0.0
    %269 = vmatprep.subr.mxu0 0.0
    %270 = vmatpush1.msra.mxu0 0.0
    %271 = vmatprep.subr.mxu0 0.0
    %272 = vmatpush1.msra.mxu0 0.0
    %273 = vmatprep.subr.mxu0 0.0
    %274 = vmatpush1.msra.mxu0 0.0
    %275 = vmatprep.subr.mxu0 0.0
    %276 = vmatpush1.msra.mxu0 0.0
    %277 = vmatprep.subr.mxu0 0.0
    %278 = vmatpush1.msra.mxu0 0.0
    %279 = vmatprep.mubr.f32.mxu0 0.0
    %280 = vmatmul.mubr.f32.gmra.mrb[0].mxu0 %v210
    %v281 = vpop.f32.mrb[0].mxu0
    %v282 = vadd.f32 %v207, %v281
    %v283 = vpop.f32.mrb[0].mxu0
    %284 = vmatprep.mubr.f32.mxu0 0.0
    %285 = vmatmul.mubr.f32.gmra.mrb[0].mxu0 %v213
    %v286 = vpop.f32.mrb[0].mxu0
    %v287 = vadd.f32 %v207, %v286
    %v288 = vpop.f32.mrb[0].mxu0
    %289 = vdwg.mxu0
    %v291 = vsel %vm116, %v190, 0
    %v294 = vsel %vm116, %v282, 0
    %296 = vmatprep.subr.mxu0 0.0
    %297 = vmatpush1.xpose.msra.mxu0 %v294
    %298 = vmatprep.subr.mxu0 0.0
    %299 = vmatpush1.xpose.msra.mxu0 0.0
    %300 = vmatprep.subr.mxu0 0.0
    %301 = vmatpush1.xpose.msra.mxu0 0.0
    %302 = vmatprep.subr.mxu0 0.0
    %303 = vmatpush1.xpose.msra.mxu0 0.0
    %304 = vmatprep.subr.mxu0 0.0
    %305 = vmatpush1.xpose.msra.mxu0 0.0
    %306 = vmatprep.subr.mxu0 0.0
    %307 = vmatpush1.xpose.msra.mxu0 0.0
    %308 = vmatprep.subr.mxu0 0.0
    %309 = vmatpush1.xpose.msra.mxu0 0.0
    %310 = vmatprep.subr.mxu0 0.0
    %311 = vmatpush1.xpose.msra.mxu0 0.0
    %312 = vmatprep.subr.mxu0 0.0
    %313 = vmatpush1.xpose.msra.mxu0 0.0
    %314 = vmatprep.subr.mxu0 0.0
    %315 = vmatpush1.xpose.msra.mxu0 0.0
    %316 = vmatprep.subr.mxu0 0.0
    %317 = vmatpush1.xpose.msra.mxu0 0.0
    %318 = vmatprep.subr.mxu0 0.0
    %319 = vmatpush1.xpose.msra.mxu0 0.0
    %320 = vmatprep.subr.mxu0 0.0
    %321 = vmatpush1.xpose.msra.mxu0 0.0
    %322 = vmatprep.subr.mxu0 0.0
    %323 = vmatpush1.xpose.msra.mxu0 0.0
    %324 = vmatprep.subr.mxu0 0.0
    %325 = vmatpush1.xpose.msra.mxu0 0.0
    %326 = vmatprep.subr.mxu0 0.0
    %327 = vmatpush1.xpose.msra.mxu0 0.0
    %328 = vmatprep.subr.mxu0 0.0
    %329 = vmatpush1.xpose.msra.mxu0 0.0
    %330 = vmatprep.subr.mxu0 0.0
    %331 = vmatpush1.xpose.msra.mxu0 0.0
    %332 = vmatprep.subr.mxu0 0.0
    %333 = vmatpush1.xpose.msra.mxu0 0.0
    %334 = vmatprep.subr.mxu0 0.0
    %335 = vmatpush1.xpose.msra.mxu0 0.0
    %336 = vmatprep.subr.mxu0 0.0
    %337 = vmatpush1.xpose.msra.mxu0 0.0
    %338 = vmatprep.subr.mxu0 0.0
    %339 = vmatpush1.xpose.msra.mxu0 0.0
    %340 = vmatprep.subr.mxu0 0.0
    %341 = vmatpush1.xpose.msra.mxu0 0.0
    %342 = vmatprep.subr.mxu0 0.0
    %343 = vmatpush1.xpose.msra.mxu0 0.0
    %344 = vmatprep.subr.mxu0 0.0
    %345 = vmatpush1.xpose.msra.mxu0 0.0
    %346 = vmatprep.subr.mxu0 0.0
    %347 = vmatpush1.xpose.msra.mxu0 0.0
    %348 = vmatprep.subr.mxu0 0.0
    %349 = vmatpush1.xpose.msra.mxu0 0.0
    %350 = vmatprep.subr.mxu0 0.0
    %351 = vmatpush1.xpose.msra.mxu0 0.0
    %352 = vmatprep.subr.mxu0 0.0
    %353 = vmatpush1.xpose.msra.mxu0 0.0
    %354 = vmatprep.subr.mxu0 0.0
    %355 = vmatpush1.xpose.msra.mxu0 0.0
    %356 = vmatprep.subr.mxu0 0.0
    %357 = vmatpush1.xpose.msra.mxu0 0.0
    %358 = vmatprep.subr.mxu0 0.0
    %359 = vmatpush1.xpose.msra.mxu0 0.0
    %360 = vmatprep.mubr.f32.mxu0 0.0
    %361 = vmatmul.mubr.f32.gmra.mrb[0].mxu0 %v291
    %v362 = vpop.f32.mrb[0].mxu0
    %v363 = vadd.f32 0.0, %v362
    %v364 = vpop.f32.mrb[0].mxu0
    %365 = vdwg.mxu0
    %v367 = vsel %vm116, %v195, 0
    %v370 = vsel %vm116, %v287, 0
    %372 = vmatprep.subr.mxu0 0.0
    %373 = vmatpush1.xpose.msra.mxu0 %v370
    %374 = vmatprep.subr.mxu0 0.0
    %375 = vmatpush1.xpose.msra.mxu0 0.0
    %376 = vmatprep.subr.mxu0 0.0
    %377 = vmatpush1.xpose.msra.mxu0 0.0
    %378 = vmatprep.subr.mxu0 0.0
    %379 = vmatpush1.xpose.msra.mxu0 0.0
    %380 = vmatprep.subr.mxu0 0.0
    %381 = vmatpush1.xpose.msra.mxu0 0.0
    %382 = vmatprep.subr.mxu0 0.0
    %383 = vmatpush1.xpose.msra.mxu0 0.0
    %384 = vmatprep.subr.mxu0 0.0
    %385 = vmatpush1.xpose.msra.mxu0 0.0
    %386 = vmatprep.subr.mxu0 0.0
    %387 = vmatpush1.xpose.msra.mxu0 0.0
    %388 = vmatprep.subr.mxu0 0.0
    %389 = vmatpush1.xpose.msra.mxu0 0.0
    %390 = vmatprep.subr.mxu0 0.0
    %391 = vmatpush1.xpose.msra.mxu0 0.0
    %392 = vmatprep.subr.mxu0 0.0
    %393 = vmatpush1.xpose.msra.mxu0 0.0
    %394 = vmatprep.subr.mxu0 0.0
    %395 = vmatpush1.xpose.msra.mxu0 0.0
    %396 = vmatprep.subr.mxu0 0.0
    %397 = vmatpush1.xpose.msra.mxu0 0.0
    %398 = vmatprep.subr.mxu0 0.0
    %399 = vmatpush1.xpose.msra.mxu0 0.0
    %400 = vmatprep.subr.mxu0 0.0
    %401 = vmatpush1.xpose.msra.mxu0 0.0
    %402 = vmatprep.subr.mxu0 0.0
    %403 = vmatpush1.xpose.msra.mxu0 0.0
    %404 = vmatprep.subr.mxu0 0.0
    %405 = vmatpush1.xpose.msra.mxu0 0.0
    %406 = vmatprep.subr.mxu0 0.0
    %407 = vmatpush1.xpose.msra.mxu0 0.0
    %408 = vmatprep.subr.mxu0 0.0
    %409 = vmatpush1.xpose.msra.mxu0 0.0
    %410 = vmatprep.subr.mxu0 0.0
    %411 = vmatpush1.xpose.msra.mxu0 0.0
    %412 = vmatprep.subr.mxu0 0.0
    %413 = vmatpush1.xpose.msra.mxu0 0.0
    %414 = vmatprep.subr.mxu0 0.0
    %415 = vmatpush1.xpose.msra.mxu0 0.0
    %416 = vmatprep.subr.mxu0 0.0
    %417 = vmatpush1.xpose.msra.mxu0 0.0
    %418 = vmatprep.subr.mxu0 0.0
    %419 = vmatpush1.xpose.msra.mxu0 0.0
    %420 = vmatprep.subr.mxu0 0.0
    %421 = vmatpush1.xpose.msra.mxu0 0.0
    %422 = vmatprep.subr.mxu0 0.0
    %423 = vmatpush1.xpose.msra.mxu0 0.0
    %424 = vmatprep.subr.mxu0 0.0
    %425 = vmatpush1.xpose.msra.mxu0 0.0
    %426 = vmatprep.subr.mxu0 0.0
    %427 = vmatpush1.xpose.msra.mxu0 0.0
    %428 = vmatprep.subr.mxu0 0.0
    %429 = vmatpush1.xpose.msra.mxu0 0.0
    %430 = vmatprep.subr.mxu0 0.0
    %431 = vmatpush1.xpose.msra.mxu0 0.0
    %432 = vmatprep.subr.mxu0 0.0
    %433 = vmatpush1.xpose.msra.mxu0 0.0
    %434 = vmatprep.subr.mxu0 0.0
    %435 = vmatpush1.xpose.msra.mxu0 0.0
    %436 = vmatprep.mubr.f32.mxu0 0.0
    %437 = vmatmul.mubr.f32.gmra.mrb[0].mxu0 %v367
    %v438 = vpop.f32.mrb[0].mxu0
    %v439 = vadd.f32 0.0, %v438
    %v440 = vpop.f32.mrb[0].mxu0
    %441 = vdwg.mxu0
    %vm442 = vcmask 64512
    %v443 = vsel %vm442, %v363, -inf
    %444 = vmax.xlane.f32.xlu0 %v443
    %v445 = vpop.xlane.xlu0 %444
    %v446 = vsel %vm442, %v439, -inf
    %447 = vmax.xlane.f32.xlu0 %v446
    %v448 = vpop.xlane.xlu0 %447
    %v449 = vsub.f32 %v363, %v445
    %v450 = vsub.f32 %v439, %v448
    %v451 = vmul.f32 %v449, 1.442695
    %v452 = vpow.pop %v451
    %v453 = vmul.f32 %v450, 1.442695
    %v454 = vpow.pop %v453
    %v455 = vsel %vm442, %v452, 0.0
    %456 = vadd.xlane.f32.xlu0 %v455
    %v457 = vpop.xlane.xlu0 %456
    %v458 = vsel %vm442, %v454, 0.0
    %459 = vadd.xlane.f32.xlu0 %v458
    %v460 = vpop.xlane.xlu0 %459
    %v461 = vrcp.pop %v457
    %v462 = vrcp.pop %v460
    %v463 = vmul.f32 %v452, %v461
    %v464 = vmul.f32 %v454, %v462
    %465 = vrot.lane.b32.xlu0 %v282, 96
    %v466 = vpop.permute.xlu0 %465
    %v469 = vsel %vm442, %v463, 0
    %471 = vmatprep.subr.mxu0 0.0
    %472 = vmatpush1.msra.mxu0 %v466
    %473 = vmatprep.subr.mxu0 0.0
    %474 = vmatpush1.msra.mxu0 0.0
    %475 = vmatprep.subr.mxu0 0.0
    %476 = vmatpush1.msra.mxu0 0.0
    %477 = vmatprep.subr.mxu0 0.0
    %478 = vmatpush1.msra.mxu0 0.0
    %479 = vmatprep.subr.mxu0 0.0
    %480 = vmatpush1.msra.mxu0 0.0
    %481 = vmatprep.subr.mxu0 0.0
    %482 = vmatpush1.msra.mxu0 0.0
    %483 = vmatprep.subr.mxu0 0.0
    %484 = vmatpush1.msra.mxu0 0.0
    %485 = vmatprep.subr.mxu0 0.0
    %486 = vmatpush1.msra.mxu0 0.0
    %487 = vmatprep.subr.mxu0 0.0
    %488 = vmatpush1.msra.mxu0 0.0
    %489 = vmatprep.subr.mxu0 0.0
    %490 = vmatpush1.msra.mxu0 0.0
    %491 = vmatprep.subr.mxu0 0.0
    %492 = vmatpush1.msra.mxu0 0.0
    %493 = vmatprep.subr.mxu0 0.0
    %494 = vmatpush1.msra.mxu0 0.0
    %495 = vmatprep.subr.mxu0 0.0
    %496 = vmatpush1.msra.mxu0 0.0
    %497 = vmatprep.subr.mxu0 0.0
    %498 = vmatpush1.msra.mxu0 0.0
    %499 = vmatprep.subr.mxu0 0.0
    %500 = vmatpush1.msra.mxu0 0.0
    %501 = vmatprep.subr.mxu0 0.0
    %502 = vmatpush1.msra.mxu0 0.0
    %503 = vmatprep.subr.mxu0 0.0
    %504 = vmatpush1.msra.mxu0 0.0
    %505 = vmatprep.subr.mxu0 0.0
    %506 = vmatpush1.msra.mxu0 0.0
    %507 = vmatprep.subr.mxu0 0.0
    %508 = vmatpush1.msra.mxu0 0.0
    %509 = vmatprep.subr.mxu0 0.0
    %510 = vmatpush1.msra.mxu0 0.0
    %511 = vmatprep.subr.mxu0 0.0
    %512 = vmatpush1.msra.mxu0 0.0
    %513 = vmatprep.subr.mxu0 0.0
    %514 = vmatpush1.msra.mxu0 0.0
    %515 = vmatprep.subr.mxu0 0.0
    %516 = vmatpush1.msra.mxu0 0.0
    %517 = vmatprep.subr.mxu0 0.0
    %518 = vmatpush1.msra.mxu0 0.0
    %519 = vmatprep.subr.mxu0 0.0
    %520 = vmatpush1.msra.mxu0 0.0
    %521 = vmatprep.subr.mxu0 0.0
    %522 = vmatpush1.msra.mxu0 0.0
    %523 = vmatprep.subr.mxu0 0.0
    %524 = vmatpush1.msra.mxu0 0.0
    %525 = vmatprep.subr.mxu0 0.0
    %526 = vmatpush1.msra.mxu0 0.0
    %527 = vmatprep.subr.mxu0 0.0
    %528 = vmatpush1.msra.mxu0 0.0
    %529 = vmatprep.subr.mxu0 0.0
    %530 = vmatpush1.msra.mxu0 0.0
    %531 = vmatprep.subr.mxu0 0.0
    %532 = vmatpush1.msra.mxu0 0.0
    %533 = vmatprep.subr.mxu0 0.0
    %534 = vmatpush1.msra.mxu0 0.0
    %535 = vmatprep.mubr.f32.mxu0 0.0
    %536 = vmatmul.mubr.f32.gmra.mrb[0].mxu0 %v469
    %v537 = vpop.f32.mrb[0].mxu0
    %v538 = vadd.f32 0.0, %v537
    %v539 = vpop.f32.mrb[0].mxu0
    %540 = vdwg.mxu0
    %541 = vrot.lane.b32.xlu0 %v287, 96
    %v542 = vpop.permute.xlu0 %541
    %v545 = vsel %vm442, %v464, 0
    %547 = vmatprep.subr.mxu0 0.0
    %548 = vmatpush1.msra.mxu0 %v542
    %549 = vmatprep.subr.mxu0 0.0
    %550 = vmatpush1.msra.mxu0 0.0
    %551 = vmatprep.subr.mxu0 0.0
    %552 = vmatpush1.msra.mxu0 0.0
    %553 = vmatprep.subr.mxu0 0.0
    %554 = vmatpush1.msra.mxu0 0.0
    %555 = vmatprep.subr.mxu0 0.0
    %556 = vmatpush1.msra.mxu0 0.0
    %557 = vmatprep.subr.mxu0 0.0
    %558 = vmatpush1.msra.mxu0 0.0
    %559 = vmatprep.subr.mxu0 0.0
    %560 = vmatpush1.msra.mxu0 0.0
    %561 = vmatprep.subr.mxu0 0.0
    %562 = vmatpush1.msra.mxu0 0.0
    %563 = vmatprep.subr.mxu0 0.0
    %564 = vmatpush1.msra.mxu0 0.0
    %565 = vmatprep.subr.mxu0 0.0
    %566 = vmatpush1.msra.mxu0 0.0
    %567 = vmatprep.subr.mxu0 0.0
    %568 = vmatpush1.msra.mxu0 0.0
    %569 = vmatprep.subr.mxu0 0.0
    %570 = vmatpush1.msra.mxu0 0.0
    %571 = vmatprep.subr.mxu0 0.0
    %572 = vmatpush1.msra.mxu0 0.0
    %573 = vmatprep.subr.mxu0 0.0
    %574 = vmatpush1.msra.mxu0 0.0
    %575 = vmatprep.subr.mxu0 0.0
    %576 = vmatpush1.msra.mxu0 0.0
    %577 = vmatprep.subr.mxu0 0.0
    %578 = vmatpush1.msra.mxu0 0.0
    %579 = vmatprep.subr.mxu0 0.0
    %580 = vmatpush1.msra.mxu0 0.0
    %581 = vmatprep.subr.mxu0 0.0
    %582 = vmatpush1.msra.mxu0 0.0
    %583 = vmatprep.subr.mxu0 0.0
    %584 = vmatpush1.msra.mxu0 0.0
    %585 = vmatprep.subr.mxu0 0.0
    %586 = vmatpush1.msra.mxu0 0.0
    %587 = vmatprep.subr.mxu0 0.0
    %588 = vmatpush1.msra.mxu0 0.0
    %589 = vmatprep.subr.mxu0 0.0
    %590 = vmatpush1.msra.mxu0 0.0
    %591 = vmatprep.subr.mxu0 0.0
    %592 = vmatpush1.msra.mxu0 0.0
    %593 = vmatprep.subr.mxu0 0.0
    %594 = vmatpush1.msra.mxu0 0.0
    %595 = vmatprep.subr.mxu0 0.0
    %596 = vmatpush1.msra.mxu0 0.0
    %597 = vmatprep.subr.mxu0 0.0
    %598 = vmatpush1.msra.mxu0 0.0
    %599 = vmatprep.subr.mxu0 0.0
    %600 = vmatpush1.msra.mxu0 0.0
    %601 = vmatprep.subr.mxu0 0.0
    %602 = vmatpush1.msra.mxu0 0.0
    %603 = vmatprep.subr.mxu0 0.0
    %604 = vmatpush1.msra.mxu0 0.0
    %605 = vmatprep.subr.mxu0 0.0
    %606 = vmatpush1.msra.mxu0 0.0
    %607 = vmatprep.subr.mxu0 0.0
    %608 = vmatpush1.msra.mxu0 0.0
    %609 = vmatprep.subr.mxu0 0.0
    %610 = vmatpush1.msra.mxu0 0.0
    %611 = vmatprep.mubr.f32.mxu0 0.0
    %612 = vmatmul.mubr.f32.gmra.mrb[0].mxu0 %v545
    %v613 = vpop.f32.mrb[0].mxu0
    %v614 = vadd.f32 0.0, %v613
    %v615 = vpop.f32.mrb[0].mxu0
    %616 = vdwg.mxu0
    %v617 = vld [vmem:[#allocation10] sm:$0xff]
    %v618 = vld [vmem:[#allocation10 + $0x8] sm:$0xff]
    %v619 = vld [vmem:[#allocation10 + $0x10] sm:$0xff]
    %v620 = vld [vmem:[#allocation10 + $0x18] sm:$0xff]
    %v621 = vld [vmem:[%s7] sm:$0x1]
    %v623 = vlaneseq
    %v624 = vshrl.u32 %v623, 7
    %v625 = vsub.s32 0, %v624
    %v626 = vrot.slane %v621, %v625
    %v629 = vsel %vm116, %v538, 0
    %v632 = vsel %vm116, %v614, 0
    %634 = vmatprep.subr.mxu0 0.0
    %635 = vmatpush1.msra.mxu0 %v617
    %636 = vmatprep.subr.mxu0 0.0
    %637 = vmatpush1.msra.mxu0 %v618
    %638 = vmatprep.subr.mxu0 0.0
    %639 = vmatpush1.msra.mxu0 %v619
    %640 = vmatprep.subr.mxu0 0.0
    %641 = vmatpush1.msra.mxu0 %v620
    %642 = vmatprep.subr.mxu0 0.0
    %643 = vmatpush1.msra.mxu0 0.0
    %644 = vmatprep.subr.mxu0 0.0
    %645 = vmatpush1.msra.mxu0 0.0
    %646 = vmatprep.subr.mxu0 0.0
    %647 = vmatpush1.msra.mxu0 0.0
    %648 = vmatprep.subr.mxu0 0.0
    %649 = vmatpush1.msra.mxu0 0.0
    %650 = vmatprep.subr.mxu0 0.0
    %651 = vmatpush1.msra.mxu0 0.0
    %652 = vmatprep.subr.mxu0 0.0
    %653 = vmatpush1.msra.mxu0 0.0
    %654 = vmatprep.subr.mxu0 0.0
    %655 = vmatpush1.msra.mxu0 0.0
    %656 = vmatprep.subr.mxu0 0.0
    %657 = vmatpush1.msra.mxu0 0.0
    %658 = vmatprep.subr.mxu0 0.0
    %659 = vmatpush1.msra.mxu0 0.0
    %660 = vmatprep.subr.mxu0 0.0
    %661 = vmatpush1.msra.mxu0 0.0
    %662 = vmatprep.subr.mxu0 0.0
    %663 = vmatpush1.msra.mxu0 0.0
    %664 = vmatprep.subr.mxu0 0.0
    %665 = vmatpush1.msra.mxu0 0.0
    %666 = vmatprep.subr.mxu0 0.0
    %667 = vmatpush1.msra.mxu0 0.0
    %668 = vmatprep.subr.mxu0 0.0
    %669 = vmatpush1.msra.mxu0 0.0
    %670 = vmatprep.subr.mxu0 0.0
    %671 = vmatpush1.msra.mxu0 0.0
    %672 = vmatprep.subr.mxu0 0.0
    %673 = vmatpush1.msra.mxu0 0.0
    %674 = vmatprep.subr.mxu0 0.0
    %675 = vmatpush1.msra.mxu0 0.0
    %676 = vmatprep.subr.mxu0 0.0
    %677 = vmatpush1.msra.mxu0 0.0
    %678 = vmatprep.subr.mxu0 0.0
    %679 = vmatpush1.msra.mxu0 0.0
    %680 = vmatprep.subr.mxu0 0.0
    %681 = vmatpush1.msra.mxu0 0.0
    %682 = vmatprep.subr.mxu0 0.0
    %683 = vmatpush1.msra.mxu0 0.0
    %684 = vmatprep.subr.mxu0 0.0
    %685 = vmatpush1.msra.mxu0 0.0
    %686 = vmatprep.subr.mxu0 0.0
    %687 = vmatpush1.msra.mxu0 0.0
    %688 = vmatprep.subr.mxu0 0.0
    %689 = vmatpush1.msra.mxu0 0.0
    %690 = vmatprep.subr.mxu0 0.0
    %691 = vmatpush1.msra.mxu0 0.0
    %692 = vmatprep.subr.mxu0 0.0
    %693 = vmatpush1.msra.mxu0 0.0
    %694 = vmatprep.subr.mxu0 0.0
    %695 = vmatpush1.msra.mxu0 0.0
    %696 = vmatprep.subr.mxu0 0.0
    %697 = vmatpush1.msra.mxu0 0.0
    %698 = vmatprep.mubr.f32.mxu0 0.0
    %699 = vmatmul.mubr.f32.gmra.mrb[0].mxu0 %v629
    %v700 = vpop.f32.mrb[0].mxu0
    %v701 = vadd.f32 %v626, %v700
    %v702 = vpop.f32.mrb[0].mxu0
    %703 = vmatprep.mubr.f32.mxu0 0.0
    %704 = vmatmul.mubr.f32.gmra.mrb[0].mxu0 %v632
    %v705 = vpop.f32.mrb[0].mxu0
    %v706 = vadd.f32 %v626, %v705
    %v707 = vpop.f32.mrb[0].mxu0
    %708 = vdwg.mxu0
    %v709 = vtanh.pop %v701
    %v710 = vtanh.pop %v706
    %711 = vst.msk [vmem:[#allocation11] sm:$0xff] %vm116, %v709
    %712 = vst.msk [vmem:[#allocation11 + $0x8] sm:$0xff] %vm116, %v710
    %713 = vst.msk [vmem:[#allocation12] sm:$0xff] %vm442, %v463
    %714 = vst.msk [vmem:[#allocation12 + $0x8] sm:$0xff] %vm442, %v464
    // Predicated region
    $region54: #{tpu_custom_call.1} parent=1 // pred_check
      _
    $region55: #{tpu_custom_call.1} parent=1 // pred_check_branch
      %716 = sbr.rel (0) target = $region57
    $region56: #{tpu_custom_call.1} parent=1 // pred_region
      %s718 = ssub.s32 256, 256
      %719 = vsyncadd [#allocation4], %s718
      %s720 = sshll.u32 [#allocation11], 4
      %s721 = int_to_ptr.vmem [resolvable:$true] %s720
      %726 = dma.vmem_to_hbm [thread:$0]  %s721, 256, %s8, [#allocation4], 128, 128, 8
    $region57: #{tpu_custom_call.1} parent=1 // pred_fallthru
      _
    // Predicated region
    $region58: #{tpu_custom_call.1} parent=1 // pred_check
      _
    $region59: #{tpu_custom_call.1} parent=1 // pred_check_branch
      %728 = sbr.rel (0) target = $region61
    $region60: #{tpu_custom_call.1} parent=1 // pred_region
      %s730 = ssub.s32 256, 256
      %731 = vsyncadd [#allocation13], %s730
      %s732 = sshll.u32 [#allocation12], 4
      %s733 = int_to_ptr.vmem [resolvable:$true] %s732
      %738 = dma.vmem_to_hbm [thread:$0]  %s733, 256, %s9, [#allocation13], 128, 128, 8
    $region61: #{tpu_custom_call.1} parent=1 // pred_fallthru
      _
    // Predicated region
    $region62: #{tpu_custom_call.1} parent=1 // pred_check
      _
    $region63: #{tpu_custom_call.1} parent=1 // pred_check_branch
      %740 = sbr.rel (0) target = $region65
    $region64: #{tpu_custom_call.1} parent=1 // pred_region
      %741 = dma.done [#allocation4], 256
    $region65: #{tpu_custom_call.1} parent=1 // pred_fallthru
      _
    // Predicated region
    $region66: #{tpu_custom_call.1} parent=1 // pred_check
      _
    $region67: #{tpu_custom_call.1} parent=1 // pred_check_branch
      %743 = sbr.rel (0) target = $region69
    $region68: #{tpu_custom_call.1} parent=1 // pred_region
      %744 = dma.done [#allocation13], 256
    $region69: #{tpu_custom_call.1} parent=1 // pred_fallthru
      _
    %745 = vsyncpa [#allocation3], 1
    %746 = vsyncpa [#allocation6], 1
    %747 = vsyncpa [#allocation9], 1
    %748 = vsyncpa [#allocation4], 1
    %749 = vsyncpa [#allocation13], 1

</llo_original>
